<compile_context>
chip_gen: v6e
topology: v6e:2x2x1
jax: 0.10.0
libtpu: 0.0.40
codegen_flags: <defaults>
</compile_context>

<pallas_src>
import jax
import jax.numpy as jnp
from jax import lax
from jax.experimental import pallas as pl
from jax.experimental.pallas import tpu as pltpu


# ---------------------------------------------------------------------------
# Fused kernel: all LSTM layers + final Linear, one invocation, no grid.
# ---------------------------------------------------------------------------
def _make_kernel(num_layers, T, B, H):
    G = 4 * H  # packed gate width (= 128 for H=32): one lane-dense vreg block

    def kernel(*refs):
        # refs = gin0, whh0, (wih_l, whh_l, b_l for l>=1), fc_w, fc_b, out,
        #        gin_sc, seq_sc
        gin0_ref = refs[0]
        whh0_ref = refs[1]
        rest = refs[2:2 + 3 * (num_layers - 1)]
        base = 2 + 3 * (num_layers - 1)
        fcw_ref = refs[base]
        fcb_ref = refs[base + 1]
        out_ref = refs[base + 2]
        gin_sc = refs[base + 3]    # (T*B, 4H) per-layer hoisted input projections
        seq_sc = refs[base + 4]    # (T*B, H)  inter-layer hidden sequence

        # Per-lane affine that turns a single tanh over the packed [i|f|g|o] block
        # into sigmoid for i/f/o (whose weight columns are pre-scaled by 0.5) and
        # tanh for g.  Built once, hoisted out of all loops.
        lane = lax.broadcasted_iota(jnp.int32, (1, G), 1)
        is_g = jnp.logical_and(lane >= 2 * H, lane < 3 * H)
        act_scale = jnp.where(is_g, 1.0, 0.5).astype(jnp.float32)
        act_shift = jnp.where(is_g, 0.0, 0.5).astype(jnp.float32)

        h_last = None
        for l in range(num_layers):
            if l == 0:
                whh_ref = whh0_ref
                gin_ref = gin0_ref          # layer-0 projections precomputed outside
            else:
                wih_ref, whh_ref, b_ref = rest[3 * (l - 1):3 * l]
                # Whole-sequence input projection hoisted out of the recurrence:
                # one (T*B, H) @ (H, 4H) MXU matmul per layer.
                gin_sc[...] = (
                    jnp.dot(seq_sc[...], wih_ref[...],
                            preferred_element_type=jnp.float32)
                    + b_ref[...]
                )
                gin_ref = gin_sc

            write_seq = l < (num_layers - 1)

            def step(t, carry, _whh=whh_ref, _gin=gin_ref, _write=write_seq):
                h, c = carry                                    # (B, H) each
                r0 = pl.multiple_of(t * B, B)
                # Single small recurrent matmul per step: (B,H)@(H,4H).
                pre = _gin[pl.ds(r0, B), :] + jnp.dot(
                    h, _whh[...], preferred_element_type=jnp.float32)   # (B, 4H)
                t_all = jnp.tanh(pre)                  # ONE EUP pass for all 4 gates
                act = t_all * act_scale + act_shift    # i,f,o -> sigmoid; g -> tanh
                i = act[:, 0 * H:1 * H]
                f = act[:, 1 * H:2 * H]
                g = act[:, 2 * H:3 * H]
                o = act[:, 3 * H:4 * H]
                c = f * c + i * g
                h = o * jnp.tanh(c)
                if _write:
                    seq_sc[pl.ds(r0, B), :] = h
                return (h, c)

            init = (jnp.zeros((B, H), jnp.float32),
                    jnp.zeros((B, H), jnp.float32))
            h_last, _ = lax.fori_loop(0, T, step, init, unroll=True)

        # Final Linear(H, 1): VPU multiply + XLU lane reduction (no MXU round-trip
        # for a single output lane).
        out_ref[...] = (
            jnp.sum(h_last * fcw_ref[...], axis=-1, keepdims=True) + fcb_ref[...]
        ).astype(out_ref.dtype)

    return kernel


# ---------------------------------------------------------------------------
# Parameter preparation (once): transpose, pack gates, pre-scale i/f/o columns
# by 0.5 (sigmoid-via-tanh), pre-sum biases.  This is the single source of
# truth for the in-kernel gate layout.
# ---------------------------------------------------------------------------
def prepare_params(params):
    H = params["lstm"][0][1].shape[1]     # whh is (4H, H)
    G = 4 * H
    # PyTorch gate order along the 4H axis: [i, f, g, o].
    col_scale = jnp.concatenate([
        jnp.full((2 * H,), 0.5, jnp.float32),   # i, f  (sigmoid gates)
        jnp.ones((H,), jnp.float32),            # g     (tanh gate)
        jnp.full((H,), 0.5, jnp.float32),       # o     (sigmoid gate)
    ])
    layers = []
    for (wih, whh, bih, bhh) in params["lstm"]:
        wih_t = wih.T.astype(jnp.float32) * col_scale            # (d_in, 4H)
        whh_t = whh.T.astype(jnp.float32) * col_scale            # (H, 4H)
        b = ((bih + bhh).astype(jnp.float32) * col_scale).reshape(1, G)
        layers.append((wih_t, whh_t, b))
    fc_w = params["fc_w"].astype(jnp.float32).reshape(1, H)      # row vector (VPU FC)
    fc_b = params["fc_b"].astype(jnp.float32).reshape(1, 1)
    return {"layers": layers, "fc_w": fc_w, "fc_b": fc_b}


# ---------------------------------------------------------------------------
# Forward pass (matches LSTM.forward of the PyTorch module)
# ---------------------------------------------------------------------------
@jax.jit
def lstm_forward(prepped, x_btd):
    B, T, Din = x_btd.shape
    layers = prepped["layers"]
    num_layers = len(layers)
    H = prepped["fc_w"].shape[1]
    G = 4 * H

    # batch_first (B, T, D) -> time-major rows (T*B, Din); no lane padding.
    x2d = jnp.transpose(x_btd.astype(jnp.float32), (1, 0, 2)).reshape(T * B, Din)

    # Layer-0 input projection (tiny K = Din) hoisted into the jitted wrapper:
    # off the recurrence critical path, avoids 32x padded-K inside the kernel.
    wih0, whh0, b0 = layers[0]
    gin0 = jnp.dot(x2d, wih0, precision=jax.lax.Precision.HIGHEST) + b0   # (T*B, 4H)

    flat = [gin0, whh0]
    for (wih, whh, b) in layers[1:]:
        flat += [wih, whh, b]
    flat += [prepped["fc_w"], prepped["fc_b"]]

    return pl.pallas_call(
        _make_kernel(num_layers, T, B, H),
        out_shape=jax.ShapeDtypeStruct((B, 1), jnp.float32),
        in_specs=[pl.BlockSpec(memory_space=pltpu.MemorySpace.VMEM)] * len(flat),
        out_specs=pl.BlockSpec(memory_space=pltpu.MemorySpace.VMEM),
        scratch_shapes=[
            pltpu.VMEM((T * B, G), jnp.float32),   # per-layer hoisted input projections
            pltpu.VMEM((T * B, H), jnp.float32),   # inter-layer hidden sequence
        ],
        # Explicit VMEM budget guard (current footprint ~0.2 MiB; matters if the
        # same kernel is reused with bigger H / more layers, esp. on v7x).
        compiler_params=pltpu.CompilerParams(vmem_limit_bytes=32 * 1024 * 1024),
    )(*flat)


# ---------------------------------------------------------------------------
# Parameter init (deterministic, PyTorch-default-style uniform(-1/sqrt(H), 1/sqrt(H)))
# ---------------------------------------------------------------------------
def init_params(key, input_size, hidden_size, num_layers):
    k = 1.0 / float(hidden_size) ** 0.5
    layers = []
    for l in range(num_layers):
        d_in = input_size if l == 0 else hidden_size
        key, k1, k2, k3, k4 = jax.random.split(key, 5)
        wih = jax.random.uniform(k1, (4 * hidden_size, d_in), jnp.float32, -k, k)
        whh = jax.random.uniform(k2, (4 * hidden_size, hidden_size), jnp.float32, -k, k)
        bih = jax.random.uniform(k3, (4 * hidden_size,), jnp.float32, -k, k)
        bhh = jax.random.uniform(k4, (4 * hidden_size,), jnp.float32, -k, k)
        layers.append((wih, whh, bih, bhh))
    key, k5, k6 = jax.random.split(key, 3)
    fc_w = jax.random.uniform(k5, (1, hidden_size), jnp.float32, -k, k)
    fc_b = jax.random.uniform(k6, (1,), jnp.float32, -k, k)
    return {"lstm": layers, "fc_w": fc_w, "fc_b": fc_b}


# Pure-JAX reference for correctness checking
def lstm_forward_ref(params, x_btd):
    B = x_btd.shape[0]
    H = params["lstm"][0][1].shape[1]
    out = x_btd.astype(jnp.float32)
    for (wih, whh, bih, bhh) in params["lstm"]:
        def step(carry, x_t):
            h, c = carry
            gates = x_t @ wih.T + h @ whh.T + bih + bhh
            i, f, g, o = jnp.split(gates, 4, axis=-1)
            i, f, o = jax.nn.sigmoid(i), jax.nn.sigmoid(f), jax.nn.sigmoid(o)
            g = jnp.tanh(g)
            c = f * c + i * g
            h = o * jnp.tanh(c)
            return (h, c), h
        init = (jnp.zeros((B, H), jnp.float32), jnp.zeros((B, H), jnp.float32))
        _, hs = jax.lax.scan(step, init, jnp.transpose(out, (1, 0, 2)))
        out = jnp.transpose(hs, (1, 0, 2))
    return out[:, -1, :] @ params["fc_w"].T + params["fc_b"]


if __name__ == "__main__":
    # batch_size=16 matches the original script; input_size=4, hidden=32, 2 layers.
    B, T, INPUT_SIZE, HIDDEN, LAYERS = 16, 8, 4, 32, 2

    key = jax.random.PRNGKey(0)
    key, xk = jax.random.split(key)
    x = jax.random.normal(xk, (B, T, INPUT_SIZE), jnp.float32)
    params = init_params(key, INPUT_SIZE, HIDDEN, LAYERS)
    prepped = prepare_params(params)

    out = lstm_forward(prepped, x)
    out = jax.block_until_ready(out)

    ref = lstm_forward_ref(params, x)
    assert out.shape == (B, 1)
    # Tolerance covers f32 MXU rounding + EUP tanh-based sigmoid approximation;
    # any layout/scale bug would produce errors orders of magnitude larger.
    assert jnp.allclose(out, ref, atol=1e-3, rtol=1e-3), (out, ref)

    print("KERNEL_OK")
</pallas_src>

<mosaic_0001>
module attributes {stable_mosaic.version = 11 : i64} {
  func.func @kernel(%arg0: memref<128x128xf32, #tpu.memory_space<vmem>>, %arg1: memref<32x128xf32, #tpu.memory_space<vmem>>, %arg2: memref<32x128xf32, #tpu.memory_space<vmem>>, %arg3: memref<32x128xf32, #tpu.memory_space<vmem>>, %arg4: memref<1x128xf32, #tpu.memory_space<vmem>>, %arg5: memref<1x32xf32, #tpu.memory_space<vmem>>, %arg6: memref<1x1xf32, #tpu.memory_space<vmem>>, %arg7: memref<16x1xf32, #tpu.memory_space<vmem>>, %arg8: memref<128x128xf32, #tpu.memory_space<vmem>>, %arg9: memref<128x32xf32, #tpu.memory_space<vmem>>) attributes {dimension_semantics = [], scalar_prefetch = 0 : i64, scratch_operands = 2 : i64, tpu.core_type = #tpu.core_type<tc>} {
    %0 = tpu.iota {dimensions = array<i32: 1>} : vector<1x128xi32>
    %c64_i32 = arith.constant 64 : i32
    %1 = vector.broadcast %c64_i32 : i32 to vector<1x128xi32>
    %2 = arith.cmpi sge, %0, %1 : vector<1x128xi32>
    %c96_i32 = arith.constant 96 : i32
    %3 = vector.broadcast %c96_i32 : i32 to vector<1x128xi32>
    %4 = arith.cmpi slt, %0, %3 : vector<1x128xi32>
    %5 = arith.andi %2, %4 : vector<1x128xi1>
    %cst = arith.constant 1.000000e+00 : f32
    %cst_0 = arith.constant 5.000000e-01 : f32
    %6 = vector.broadcast %cst : f32 to vector<1x128xf32>
    %7 = vector.broadcast %cst_0 : f32 to vector<1x128xf32>
    %8 = arith.select %5, %6, %7 : vector<1x128xi1>, vector<1x128xf32>
    %cst_1 = arith.constant 0.000000e+00 : f32
    %cst_2 = arith.constant 5.000000e-01 : f32
    %9 = vector.broadcast %cst_1 : f32 to vector<1x128xf32>
    %10 = vector.broadcast %cst_2 : f32 to vector<1x128xf32>
    %11 = arith.select %5, %9, %10 : vector<1x128xi1>, vector<1x128xf32>
    %cst_3 = arith.constant 0.000000e+00 : f32
    %12 = vector.broadcast %cst_3 : f32 to vector<16x32xf32>
    %cst_4 = arith.constant 0.000000e+00 : f32
    %13 = vector.broadcast %cst_4 : f32 to vector<16x32xf32>
    %c0_i32 = arith.constant 0 : i32
    %c16_i32 = arith.constant 16 : i32
    %14 = arith.muli %c0_i32, %c16_i32 : i32
    %15 = tpu.assume_multiple %14, 16 : i32
    %16 = arith.index_cast %15 : i32 to index
    %c0 = arith.constant 0 : index
    %17 = vector.load %arg0[%16, %c0] : memref<128x128xf32, #tpu.memory_space<vmem>>, vector<16x128xf32>
    %c0_5 = arith.constant 0 : index
    %c0_6 = arith.constant 0 : index
    %18 = vector.load %arg1[%c0_5, %c0_6] : memref<32x128xf32, #tpu.memory_space<vmem>>, vector<32x128xf32>
    %cst_7 = arith.constant dense<0.000000e+00> : vector<16x128xf32>
    %19 = tpu.matmul %12, %18, %cst_7 {dimension_numbers = #tpu.dot_dimension_numbers<[1], [0], [0], [1], [0, 0, 1, 1], [], []>} : vector<16x32xf32>, vector<32x128xf32>, vector<16x128xf32> -> vector<16x128xf32>
    %20 = arith.addf %17, %19 : vector<16x128xf32>
    %21 = math.tanh %20 : vector<16x128xf32>
    %22 = vector.broadcast %8 : vector<1x128xf32> to vector<16x128xf32>
    %23 = arith.mulf %21, %22 : vector<16x128xf32>
    %24 = vector.broadcast %11 : vector<1x128xf32> to vector<16x128xf32>
    %25 = arith.addf %23, %24 : vector<16x128xf32>
    %26 = vector.extract_strided_slice %25 {offsets = [0, 0], sizes = [16, 32], strides = [1, 1]} : vector<16x128xf32> to vector<16x32xf32>
    %27 = vector.extract_strided_slice %25 {offsets = [0, 32], sizes = [16, 32], strides = [1, 1]} : vector<16x128xf32> to vector<16x32xf32>
    %28 = vector.extract_strided_slice %25 {offsets = [0, 64], sizes = [16, 32], strides = [1, 1]} : vector<16x128xf32> to vector<16x32xf32>
    %29 = vector.extract_strided_slice %25 {offsets = [0, 96], sizes = [16, 32], strides = [1, 1]} : vector<16x128xf32> to vector<16x32xf32>
    %30 = arith.mulf %27, %13 : vector<16x32xf32>
    %31 = arith.mulf %26, %28 : vector<16x32xf32>
    %32 = arith.addf %30, %31 : vector<16x32xf32>
    %33 = math.tanh %32 : vector<16x32xf32>
    %34 = arith.mulf %29, %33 : vector<16x32xf32>
    %35 = arith.index_cast %15 : i32 to index
    %c0_8 = arith.constant 0 : index
    %36 = vector.load %arg9[%35, %c0_8] : memref<128x32xf32, #tpu.memory_space<vmem>>, vector<16x32xf32>
    tpu.vector_store %arg9[%35, %c0_8], %34 {strides = array<i32>} : memref<128x32xf32, #tpu.memory_space<vmem>>, vector<16x32xf32>,
    %c1_i32 = arith.constant 1 : i32
    %c16_i32_9 = arith.constant 16 : i32
    %37 = arith.muli %c1_i32, %c16_i32_9 : i32
    %38 = tpu.assume_multiple %37, 16 : i32
    %39 = arith.index_cast %38 : i32 to index
    %c0_10 = arith.constant 0 : index
    %40 = vector.load %arg0[%39, %c0_10] : memref<128x128xf32, #tpu.memory_space<vmem>>, vector<16x128xf32>
    %c0_11 = arith.constant 0 : index
    %c0_12 = arith.constant 0 : index
    %41 = vector.load %arg1[%c0_11, %c0_12] : memref<32x128xf32, #tpu.memory_space<vmem>>, vector<32x128xf32>
    %cst_13 = arith.constant dense<0.000000e+00> : vector<16x128xf32>
    %42 = tpu.matmul %34, %41, %cst_13 {dimension_numbers = #tpu.dot_dimension_numbers<[1], [0], [0], [1], [0, 0, 1, 1], [], []>} : vector<16x32xf32>, vector<32x128xf32>, vector<16x128xf32> -> vector<16x128xf32>
    %43 = arith.addf %40, %42 : vector<16x128xf32>
    %44 = math.tanh %43 : vector<16x128xf32>
    %45 = vector.broadcast %8 : vector<1x128xf32> to vector<16x128xf32>
    %46 = arith.mulf %44, %45 : vector<16x128xf32>
    %47 = vector.broadcast %11 : vector<1x128xf32> to vector<16x128xf32>
    %48 = arith.addf %46, %47 : vector<16x128xf32>
    %49 = vector.extract_strided_slice %48 {offsets = [0, 0], sizes = [16, 32], strides = [1, 1]} : vector<16x128xf32> to vector<16x32xf32>
    %50 = vector.extract_strided_slice %48 {offsets = [0, 32], sizes = [16, 32], strides = [1, 1]} : vector<16x128xf32> to vector<16x32xf32>
    %51 = vector.extract_strided_slice %48 {offsets = [0, 64], sizes = [16, 32], strides = [1, 1]} : vector<16x128xf32> to vector<16x32xf32>
    %52 = vector.extract_strided_slice %48 {offsets = [0, 96], sizes = [16, 32], strides = [1, 1]} : vector<16x128xf32> to vector<16x32xf32>
    %53 = arith.mulf %50, %32 : vector<16x32xf32>
    %54 = arith.mulf %49, %51 : vector<16x32xf32>
    %55 = arith.addf %53, %54 : vector<16x32xf32>
    %56 = math.tanh %55 : vector<16x32xf32>
    %57 = arith.mulf %52, %56 : vector<16x32xf32>
    %58 = arith.index_cast %38 : i32 to index
    %c0_14 = arith.constant 0 : index
    %59 = vector.load %arg9[%58, %c0_14] : memref<128x32xf32, #tpu.memory_space<vmem>>, vector<16x32xf32>
    tpu.vector_store %arg9[%58, %c0_14], %57 {strides = array<i32>} : memref<128x32xf32, #tpu.memory_space<vmem>>, vector<16x32xf32>,
    %c2_i32 = arith.constant 2 : i32
    %c16_i32_15 = arith.constant 16 : i32
    %60 = arith.muli %c2_i32, %c16_i32_15 : i32
    %61 = tpu.assume_multiple %60, 16 : i32
    %62 = arith.index_cast %61 : i32 to index
    %c0_16 = arith.constant 0 : index
    %63 = vector.load %arg0[%62, %c0_16] : memref<128x128xf32, #tpu.memory_space<vmem>>, vector<16x128xf32>
    %c0_17 = arith.constant 0 : index
    %c0_18 = arith.constant 0 : index
    %64 = vector.load %arg1[%c0_17, %c0_18] : memref<32x128xf32, #tpu.memory_space<vmem>>, vector<32x128xf32>
    %cst_19 = arith.constant dense<0.000000e+00> : vector<16x128xf32>
    %65 = tpu.matmul %57, %64, %cst_19 {dimension_numbers = #tpu.dot_dimension_numbers<[1], [0], [0], [1], [0, 0, 1, 1], [], []>} : vector<16x32xf32>, vector<32x128xf32>, vector<16x128xf32> -> vector<16x128xf32>
    %66 = arith.addf %63, %65 : vector<16x128xf32>
    %67 = math.tanh %66 : vector<16x128xf32>
    %68 = vector.broadcast %8 : vector<1x128xf32> to vector<16x128xf32>
    %69 = arith.mulf %67, %68 : vector<16x128xf32>
    %70 = vector.broadcast %11 : vector<1x128xf32> to vector<16x128xf32>
    %71 = arith.addf %69, %70 : vector<16x128xf32>
    %72 = vector.extract_strided_slice %71 {offsets = [0, 0], sizes = [16, 32], strides = [1, 1]} : vector<16x128xf32> to vector<16x32xf32>
    %73 = vector.extract_strided_slice %71 {offsets = [0, 32], sizes = [16, 32], strides = [1, 1]} : vector<16x128xf32> to vector<16x32xf32>
    %74 = vector.extract_strided_slice %71 {offsets = [0, 64], sizes = [16, 32], strides = [1, 1]} : vector<16x128xf32> to vector<16x32xf32>
    %75 = vector.extract_strided_slice %71 {offsets = [0, 96], sizes = [16, 32], strides = [1, 1]} : vector<16x128xf32> to vector<16x32xf32>
    %76 = arith.mulf %73, %55 : vector<16x32xf32>
    %77 = arith.mulf %72, %74 : vector<16x32xf32>
    %78 = arith.addf %76, %77 : vector<16x32xf32>
    %79 = math.tanh %78 : vector<16x32xf32>
    %80 = arith.mulf %75, %79 : vector<16x32xf32>
    %81 = arith.index_cast %61 : i32 to index
    %c0_20 = arith.constant 0 : index
    %82 = vector.load %arg9[%81, %c0_20] : memref<128x32xf32, #tpu.memory_space<vmem>>, vector<16x32xf32>
    tpu.vector_store %arg9[%81, %c0_20], %80 {strides = array<i32>} : memref<128x32xf32, #tpu.memory_space<vmem>>, vector<16x32xf32>,
    %c3_i32 = arith.constant 3 : i32
    %c16_i32_21 = arith.constant 16 : i32
    %83 = arith.muli %c3_i32, %c16_i32_21 : i32
    %84 = tpu.assume_multiple %83, 16 : i32
    %85 = arith.index_cast %84 : i32 to index
    %c0_22 = arith.constant 0 : index
    %86 = vector.load %arg0[%85, %c0_22] : memref<128x128xf32, #tpu.memory_space<vmem>>, vector<16x128xf32>
    %c0_23 = arith.constant 0 : index
    %c0_24 = arith.constant 0 : index
    %87 = vector.load %arg1[%c0_23, %c0_24] : memref<32x128xf32, #tpu.memory_space<vmem>>, vector<32x128xf32>
    %cst_25 = arith.constant dense<0.000000e+00> : vector<16x128xf32>
    %88 = tpu.matmul %80, %87, %cst_25 {dimension_numbers = #tpu.dot_dimension_numbers<[1], [0], [0], [1], [0, 0, 1, 1], [], []>} : vector<16x32xf32>, vector<32x128xf32>, vector<16x128xf32> -> vector<16x128xf32>
    %89 = arith.addf %86, %88 : vector<16x128xf32>
    %90 = math.tanh %89 : vector<16x128xf32>
    %91 = vector.broadcast %8 : vector<1x128xf32> to vector<16x128xf32>
    %92 = arith.mulf %90, %91 : vector<16x128xf32>
    %93 = vector.broadcast %11 : vector<1x128xf32> to vector<16x128xf32>
    %94 = arith.addf %92, %93 : vector<16x128xf32>
    %95 = vector.extract_strided_slice %94 {offsets = [0, 0], sizes = [16, 32], strides = [1, 1]} : vector<16x128xf32> to vector<16x32xf32>
    %96 = vector.extract_strided_slice %94 {offsets = [0, 32], sizes = [16, 32], strides = [1, 1]} : vector<16x128xf32> to vector<16x32xf32>
    %97 = vector.extract_strided_slice %94 {offsets = [0, 64], sizes = [16, 32], strides = [1, 1]} : vector<16x128xf32> to vector<16x32xf32>
    %98 = vector.extract_strided_slice %94 {offsets = [0, 96], sizes = [16, 32], strides = [1, 1]} : vector<16x128xf32> to vector<16x32xf32>
    %99 = arith.mulf %96, %78 : vector<16x32xf32>
    %100 = arith.mulf %95, %97 : vector<16x32xf32>
    %101 = arith.addf %99, %100 : vector<16x32xf32>
    %102 = math.tanh %101 : vector<16x32xf32>
    %103 = arith.mulf %98, %102 : vector<16x32xf32>
    %104 = arith.index_cast %84 : i32 to index
    %c0_26 = arith.constant 0 : index
    %105 = vector.load %arg9[%104, %c0_26] : memref<128x32xf32, #tpu.memory_space<vmem>>, vector<16x32xf32>
    tpu.vector_store %arg9[%104, %c0_26], %103 {strides = array<i32>} : memref<128x32xf32, #tpu.memory_space<vmem>>, vector<16x32xf32>,
    %c4_i32 = arith.constant 4 : i32
    %c16_i32_27 = arith.constant 16 : i32
    %106 = arith.muli %c4_i32, %c16_i32_27 : i32
    %107 = tpu.assume_multiple %106, 16 : i32
    %108 = arith.index_cast %107 : i32 to index
    %c0_28 = arith.constant 0 : index
    %109 = vector.load %arg0[%108, %c0_28] : memref<128x128xf32, #tpu.memory_space<vmem>>, vector<16x128xf32>
    %c0_29 = arith.constant 0 : index
    %c0_30 = arith.constant 0 : index
    %110 = vector.load %arg1[%c0_29, %c0_30] : memref<32x128xf32, #tpu.memory_space<vmem>>, vector<32x128xf32>
    %cst_31 = arith.constant dense<0.000000e+00> : vector<16x128xf32>
    %111 = tpu.matmul %103, %110, %cst_31 {dimension_numbers = #tpu.dot_dimension_numbers<[1], [0], [0], [1], [0, 0, 1, 1], [], []>} : vector<16x32xf32>, vector<32x128xf32>, vector<16x128xf32> -> vector<16x128xf32>
    %112 = arith.addf %109, %111 : vector<16x128xf32>
    %113 = math.tanh %112 : vector<16x128xf32>
    %114 = vector.broadcast %8 : vector<1x128xf32> to vector<16x128xf32>
    %115 = arith.mulf %113, %114 : vector<16x128xf32>
    %116 = vector.broadcast %11 : vector<1x128xf32> to vector<16x128xf32>
    %117 = arith.addf %115, %116 : vector<16x128xf32>
    %118 = vector.extract_strided_slice %117 {offsets = [0, 0], sizes = [16, 32], strides = [1, 1]} : vector<16x128xf32> to vector<16x32xf32>
    %119 = vector.extract_strided_slice %117 {offsets = [0, 32], sizes = [16, 32], strides = [1, 1]} : vector<16x128xf32> to vector<16x32xf32>
    %120 = vector.extract_strided_slice %117 {offsets = [0, 64], sizes = [16, 32], strides = [1, 1]} : vector<16x128xf32> to vector<16x32xf32>
    %121 = vector.extract_strided_slice %117 {offsets = [0, 96], sizes = [16, 32], strides = [1, 1]} : vector<16x128xf32> to vector<16x32xf32>
    %122 = arith.mulf %119, %101 : vector<16x32xf32>
    %123 = arith.mulf %118, %120 : vector<16x32xf32>
    %124 = arith.addf %122, %123 : vector<16x32xf32>
    %125 = math.tanh %124 : vector<16x32xf32>
    %126 = arith.mulf %121, %125 : vector<16x32xf32>
    %127 = arith.index_cast %107 : i32 to index
    %c0_32 = arith.constant 0 : index
    %128 = vector.load %arg9[%127, %c0_32] : memref<128x32xf32, #tpu.memory_space<vmem>>, vector<16x32xf32>
    tpu.vector_store %arg9[%127, %c0_32], %126 {strides = array<i32>} : memref<128x32xf32, #tpu.memory_space<vmem>>, vector<16x32xf32>,
    %c5_i32 = arith.constant 5 : i32
    %c16_i32_33 = arith.constant 16 : i32
    %129 = arith.muli %c5_i32, %c16_i32_33 : i32
    %130 = tpu.assume_multiple %129, 16 : i32
    %131 = arith.index_cast %130 : i32 to index
    %c0_34 = arith.constant 0 : index
    %132 = vector.load %arg0[%131, %c0_34] : memref<128x128xf32, #tpu.memory_space<vmem>>, vector<16x128xf32>
    %c0_35 = arith.constant 0 : index
    %c0_36 = arith.constant 0 : index
    %133 = vector.load %arg1[%c0_35, %c0_36] : memref<32x128xf32, #tpu.memory_space<vmem>>, vector<32x128xf32>
    %cst_37 = arith.constant dense<0.000000e+00> : vector<16x128xf32>
    %134 = tpu.matmul %126, %133, %cst_37 {dimension_numbers = #tpu.dot_dimension_numbers<[1], [0], [0], [1], [0, 0, 1, 1], [], []>} : vector<16x32xf32>, vector<32x128xf32>, vector<16x128xf32> -> vector<16x128xf32>
    %135 = arith.addf %132, %134 : vector<16x128xf32>
    %136 = math.tanh %135 : vector<16x128xf32>
    %137 = vector.broadcast %8 : vector<1x128xf32> to vector<16x128xf32>
    %138 = arith.mulf %136, %137 : vector<16x128xf32>
    %139 = vector.broadcast %11 : vector<1x128xf32> to vector<16x128xf32>
    %140 = arith.addf %138, %139 : vector<16x128xf32>
    %141 = vector.extract_strided_slice %140 {offsets = [0, 0], sizes = [16, 32], strides = [1, 1]} : vector<16x128xf32> to vector<16x32xf32>
    %142 = vector.extract_strided_slice %140 {offsets = [0, 32], sizes = [16, 32], strides = [1, 1]} : vector<16x128xf32> to vector<16x32xf32>
    %143 = vector.extract_strided_slice %140 {offsets = [0, 64], sizes = [16, 32], strides = [1, 1]} : vector<16x128xf32> to vector<16x32xf32>
    %144 = vector.extract_strided_slice %140 {offsets = [0, 96], sizes = [16, 32], strides = [1, 1]} : vector<16x128xf32> to vector<16x32xf32>
    %145 = arith.mulf %142, %124 : vector<16x32xf32>
    %146 = arith.mulf %141, %143 : vector<16x32xf32>
    %147 = arith.addf %145, %146 : vector<16x32xf32>
    %148 = math.tanh %147 : vector<16x32xf32>
    %149 = arith.mulf %144, %148 : vector<16x32xf32>
    %150 = arith.index_cast %130 : i32 to index
    %c0_38 = arith.constant 0 : index
    %151 = vector.load %arg9[%150, %c0_38] : memref<128x32xf32, #tpu.memory_space<vmem>>, vector<16x32xf32>
    tpu.vector_store %arg9[%150, %c0_38], %149 {strides = array<i32>} : memref<128x32xf32, #tpu.memory_space<vmem>>, vector<16x32xf32>,
    %c6_i32 = arith.constant 6 : i32
    %c16_i32_39 = arith.constant 16 : i32
    %152 = arith.muli %c6_i32, %c16_i32_39 : i32
    %153 = tpu.assume_multiple %152, 16 : i32
    %154 = arith.index_cast %153 : i32 to index
    %c0_40 = arith.constant 0 : index
    %155 = vector.load %arg0[%154, %c0_40] : memref<128x128xf32, #tpu.memory_space<vmem>>, vector<16x128xf32>
    %c0_41 = arith.constant 0 : index
    %c0_42 = arith.constant 0 : index
    %156 = vector.load %arg1[%c0_41, %c0_42] : memref<32x128xf32, #tpu.memory_space<vmem>>, vector<32x128xf32>
    %cst_43 = arith.constant dense<0.000000e+00> : vector<16x128xf32>
    %157 = tpu.matmul %149, %156, %cst_43 {dimension_numbers = #tpu.dot_dimension_numbers<[1], [0], [0], [1], [0, 0, 1, 1], [], []>} : vector<16x32xf32>, vector<32x128xf32>, vector<16x128xf32> -> vector<16x128xf32>
    %158 = arith.addf %155, %157 : vector<16x128xf32>
    %159 = math.tanh %158 : vector<16x128xf32>
    %160 = vector.broadcast %8 : vector<1x128xf32> to vector<16x128xf32>
    %161 = arith.mulf %159, %160 : vector<16x128xf32>
    %162 = vector.broadcast %11 : vector<1x128xf32> to vector<16x128xf32>
    %163 = arith.addf %161, %162 : vector<16x128xf32>
    %164 = vector.extract_strided_slice %163 {offsets = [0, 0], sizes = [16, 32], strides = [1, 1]} : vector<16x128xf32> to vector<16x32xf32>
    %165 = vector.extract_strided_slice %163 {offsets = [0, 32], sizes = [16, 32], strides = [1, 1]} : vector<16x128xf32> to vector<16x32xf32>
    %166 = vector.extract_strided_slice %163 {offsets = [0, 64], sizes = [16, 32], strides = [1, 1]} : vector<16x128xf32> to vector<16x32xf32>
    %167 = vector.extract_strided_slice %163 {offsets = [0, 96], sizes = [16, 32], strides = [1, 1]} : vector<16x128xf32> to vector<16x32xf32>
    %168 = arith.mulf %165, %147 : vector<16x32xf32>
    %169 = arith.mulf %164, %166 : vector<16x32xf32>
    %170 = arith.addf %168, %169 : vector<16x32xf32>
    %171 = math.tanh %170 : vector<16x32xf32>
    %172 = arith.mulf %167, %171 : vector<16x32xf32>
    %173 = arith.index_cast %153 : i32 to index
    %c0_44 = arith.constant 0 : index
    %174 = vector.load %arg9[%173, %c0_44] : memref<128x32xf32, #tpu.memory_space<vmem>>, vector<16x32xf32>
    tpu.vector_store %arg9[%173, %c0_44], %172 {strides = array<i32>} : memref<128x32xf32, #tpu.memory_space<vmem>>, vector<16x32xf32>,
    %c7_i32 = arith.constant 7 : i32
    %c16_i32_45 = arith.constant 16 : i32
    %175 = arith.muli %c7_i32, %c16_i32_45 : i32
    %176 = tpu.assume_multiple %175, 16 : i32
    %177 = arith.index_cast %176 : i32 to index
    %c0_46 = arith.constant 0 : index
    %178 = vector.load %arg0[%177, %c0_46] : memref<128x128xf32, #tpu.memory_space<vmem>>, vector<16x128xf32>
    %c0_47 = arith.constant 0 : index
    %c0_48 = arith.constant 0 : index
    %179 = vector.load %arg1[%c0_47, %c0_48] : memref<32x128xf32, #tpu.memory_space<vmem>>, vector<32x128xf32>
    %cst_49 = arith.constant dense<0.000000e+00> : vector<16x128xf32>
    %180 = tpu.matmul %172, %179, %cst_49 {dimension_numbers = #tpu.dot_dimension_numbers<[1], [0], [0], [1], [0, 0, 1, 1], [], []>} : vector<16x32xf32>, vector<32x128xf32>, vector<16x128xf32> -> vector<16x128xf32>
    %181 = arith.addf %178, %180 : vector<16x128xf32>
    %182 = math.tanh %181 : vector<16x128xf32>
    %183 = vector.broadcast %8 : vector<1x128xf32> to vector<16x128xf32>
    %184 = arith.mulf %182, %183 : vector<16x128xf32>
    %185 = vector.broadcast %11 : vector<1x128xf32> to vector<16x128xf32>
    %186 = arith.addf %184, %185 : vector<16x128xf32>
    %187 = vector.extract_strided_slice %186 {offsets = [0, 0], sizes = [16, 32], strides = [1, 1]} : vector<16x128xf32> to vector<16x32xf32>
    %188 = vector.extract_strided_slice %186 {offsets = [0, 32], sizes = [16, 32], strides = [1, 1]} : vector<16x128xf32> to vector<16x32xf32>
    %189 = vector.extract_strided_slice %186 {offsets = [0, 64], sizes = [16, 32], strides = [1, 1]} : vector<16x128xf32> to vector<16x32xf32>
    %190 = vector.extract_strided_slice %186 {offsets = [0, 96], sizes = [16, 32], strides = [1, 1]} : vector<16x128xf32> to vector<16x32xf32>
    %191 = arith.mulf %188, %170 : vector<16x32xf32>
    %192 = arith.mulf %187, %189 : vector<16x32xf32>
    %193 = arith.addf %191, %192 : vector<16x32xf32>
    %194 = math.tanh %193 : vector<16x32xf32>
    %195 = arith.mulf %190, %194 : vector<16x32xf32>
    %196 = arith.index_cast %176 : i32 to index
    %c0_50 = arith.constant 0 : index
    %197 = vector.load %arg9[%196, %c0_50] : memref<128x32xf32, #tpu.memory_space<vmem>>, vector<16x32xf32>
    tpu.vector_store %arg9[%196, %c0_50], %195 {strides = array<i32>} : memref<128x32xf32, #tpu.memory_space<vmem>>, vector<16x32xf32>,
    %c8_i32 = arith.constant 8 : i32
    %c0_51 = arith.constant 0 : index
    %c0_52 = arith.constant 0 : index
    %198 = vector.load %arg9[%c0_51, %c0_52] : memref<128x32xf32, #tpu.memory_space<vmem>>, vector<128x32xf32>
    %c0_53 = arith.constant 0 : index
    %c0_54 = arith.constant 0 : index
    %199 = vector.load %arg2[%c0_53, %c0_54] : memref<32x128xf32, #tpu.memory_space<vmem>>, vector<32x128xf32>
    %cst_55 = arith.constant dense<0.000000e+00> : vector<128x128xf32>
    %200 = tpu.matmul %198, %199, %cst_55 {dimension_numbers = #tpu.dot_dimension_numbers<[1], [0], [0], [1], [0, 0, 1, 1], [], []>} : vector<128x32xf32>, vector<32x128xf32>, vector<128x128xf32> -> vector<128x128xf32>
    %c0_56 = arith.constant 0 : index
    %c0_57 = arith.constant 0 : index
    %201 = vector.load %arg4[%c0_56, %c0_57] : memref<1x128xf32, #tpu.memory_space<vmem>>, vector<1x128xf32>
    %202 = vector.broadcast %201 : vector<1x128xf32> to vector<128x128xf32>
    %203 = arith.addf %200, %202 : vector<128x128xf32>
    %c0_58 = arith.constant 0 : index
    %c0_59 = arith.constant 0 : index
    %204 = vector.load %arg8[%c0_58, %c0_59] : memref<128x128xf32, #tpu.memory_space<vmem>>, vector<128x128xf32>
    tpu.vector_store %arg8[%c0_58, %c0_59], %203 {strides = array<i32>} : memref<128x128xf32, #tpu.memory_space<vmem>>, vector<128x128xf32>,
    %cst_60 = arith.constant 0.000000e+00 : f32
    %205 = vector.broadcast %cst_60 : f32 to vector<16x32xf32>
    %cst_61 = arith.constant 0.000000e+00 : f32
    %206 = vector.broadcast %cst_61 : f32 to vector<16x32xf32>
    %c0_i32_62 = arith.constant 0 : i32
    %c16_i32_63 = arith.constant 16 : i32
    %207 = arith.muli %c0_i32_62, %c16_i32_63 : i32
    %208 = tpu.assume_multiple %207, 16 : i32
    %209 = arith.index_cast %208 : i32 to index
    %c0_64 = arith.constant 0 : index
    %210 = vector.load %arg8[%209, %c0_64] : memref<128x128xf32, #tpu.memory_space<vmem>>, vector<16x128xf32>
    %c0_65 = arith.constant 0 : index
    %c0_66 = arith.constant 0 : index
    %211 = vector.load %arg3[%c0_65, %c0_66] : memref<32x128xf32, #tpu.memory_space<vmem>>, vector<32x128xf32>
    %cst_67 = arith.constant dense<0.000000e+00> : vector<16x128xf32>
    %212 = tpu.matmul %205, %211, %cst_67 {dimension_numbers = #tpu.dot_dimension_numbers<[1], [0], [0], [1], [0, 0, 1, 1], [], []>} : vector<16x32xf32>, vector<32x128xf32>, vector<16x128xf32> -> vector<16x128xf32>
    %213 = arith.addf %210, %212 : vector<16x128xf32>
    %214 = math.tanh %213 : vector<16x128xf32>
    %215 = vector.broadcast %8 : vector<1x128xf32> to vector<16x128xf32>
    %216 = arith.mulf %214, %215 : vector<16x128xf32>
    %217 = vector.broadcast %11 : vector<1x128xf32> to vector<16x128xf32>
    %218 = arith.addf %216, %217 : vector<16x128xf32>
    %219 = vector.extract_strided_slice %218 {offsets = [0, 0], sizes = [16, 32], strides = [1, 1]} : vector<16x128xf32> to vector<16x32xf32>
    %220 = vector.extract_strided_slice %218 {offsets = [0, 32], sizes = [16, 32], strides = [1, 1]} : vector<16x128xf32> to vector<16x32xf32>
    %221 = vector.extract_strided_slice %218 {offsets = [0, 64], sizes = [16, 32], strides = [1, 1]} : vector<16x128xf32> to vector<16x32xf32>
    %222 = vector.extract_strided_slice %218 {offsets = [0, 96], sizes = [16, 32], strides = [1, 1]} : vector<16x128xf32> to vector<16x32xf32>
    %223 = arith.mulf %220, %206 : vector<16x32xf32>
    %224 = arith.mulf %219, %221 : vector<16x32xf32>
    %225 = arith.addf %223, %224 : vector<16x32xf32>
    %226 = math.tanh %225 : vector<16x32xf32>
    %227 = arith.mulf %222, %226 : vector<16x32xf32>
    %c1_i32_68 = arith.constant 1 : i32
    %c16_i32_69 = arith.constant 16 : i32
    %228 = arith.muli %c1_i32_68, %c16_i32_69 : i32
    %229 = tpu.assume_multiple %228, 16 : i32
    %230 = arith.index_cast %229 : i32 to index
    %c0_70 = arith.constant 0 : index
    %231 = vector.load %arg8[%230, %c0_70] : memref<128x128xf32, #tpu.memory_space<vmem>>, vector<16x128xf32>
    %c0_71 = arith.constant 0 : index
    %c0_72 = arith.constant 0 : index
    %232 = vector.load %arg3[%c0_71, %c0_72] : memref<32x128xf32, #tpu.memory_space<vmem>>, vector<32x128xf32>
    %cst_73 = arith.constant dense<0.000000e+00> : vector<16x128xf32>
    %233 = tpu.matmul %227, %232, %cst_73 {dimension_numbers = #tpu.dot_dimension_numbers<[1], [0], [0], [1], [0, 0, 1, 1], [], []>} : vector<16x32xf32>, vector<32x128xf32>, vector<16x128xf32> -> vector<16x128xf32>
    %234 = arith.addf %231, %233 : vector<16x128xf32>
    %235 = math.tanh %234 : vector<16x128xf32>
    %236 = vector.broadcast %8 : vector<1x128xf32> to vector<16x128xf32>
    %237 = arith.mulf %235, %236 : vector<16x128xf32>
    %238 = vector.broadcast %11 : vector<1x128xf32> to vector<16x128xf32>
    %239 = arith.addf %237, %238 : vector<16x128xf32>
    %240 = vector.extract_strided_slice %239 {offsets = [0, 0], sizes = [16, 32], strides = [1, 1]} : vector<16x128xf32> to vector<16x32xf32>
    %241 = vector.extract_strided_slice %239 {offsets = [0, 32], sizes = [16, 32], strides = [1, 1]} : vector<16x128xf32> to vector<16x32xf32>
    %242 = vector.extract_strided_slice %239 {offsets = [0, 64], sizes = [16, 32], strides = [1, 1]} : vector<16x128xf32> to vector<16x32xf32>
    %243 = vector.extract_strided_slice %239 {offsets = [0, 96], sizes = [16, 32], strides = [1, 1]} : vector<16x128xf32> to vector<16x32xf32>
    %244 = arith.mulf %241, %225 : vector<16x32xf32>
    %245 = arith.mulf %240, %242 : vector<16x32xf32>
    %246 = arith.addf %244, %245 : vector<16x32xf32>
    %247 = math.tanh %246 : vector<16x32xf32>
    %248 = arith.mulf %243, %247 : vector<16x32xf32>
    %c2_i32_74 = arith.constant 2 : i32
    %c16_i32_75 = arith.constant 16 : i32
    %249 = arith.muli %c2_i32_74, %c16_i32_75 : i32
    %250 = tpu.assume_multiple %249, 16 : i32
    %251 = arith.index_cast %250 : i32 to index
    %c0_76 = arith.constant 0 : index
    %252 = vector.load %arg8[%251, %c0_76] : memref<128x128xf32, #tpu.memory_space<vmem>>, vector<16x128xf32>
    %c0_77 = arith.constant 0 : index
    %c0_78 = arith.constant 0 : index
    %253 = vector.load %arg3[%c0_77, %c0_78] : memref<32x128xf32, #tpu.memory_space<vmem>>, vector<32x128xf32>
    %cst_79 = arith.constant dense<0.000000e+00> : vector<16x128xf32>
    %254 = tpu.matmul %248, %253, %cst_79 {dimension_numbers = #tpu.dot_dimension_numbers<[1], [0], [0], [1], [0, 0, 1, 1], [], []>} : vector<16x32xf32>, vector<32x128xf32>, vector<16x128xf32> -> vector<16x128xf32>
    %255 = arith.addf %252, %254 : vector<16x128xf32>
    %256 = math.tanh %255 : vector<16x128xf32>
    %257 = vector.broadcast %8 : vector<1x128xf32> to vector<16x128xf32>
    %258 = arith.mulf %256, %257 : vector<16x128xf32>
    %259 = vector.broadcast %11 : vector<1x128xf32> to vector<16x128xf32>
    %260 = arith.addf %258, %259 : vector<16x128xf32>
    %261 = vector.extract_strided_slice %260 {offsets = [0, 0], sizes = [16, 32], strides = [1, 1]} : vector<16x128xf32> to vector<16x32xf32>
    %262 = vector.extract_strided_slice %260 {offsets = [0, 32], sizes = [16, 32], strides = [1, 1]} : vector<16x128xf32> to vector<16x32xf32>
    %263 = vector.extract_strided_slice %260 {offsets = [0, 64], sizes = [16, 32], strides = [1, 1]} : vector<16x128xf32> to vector<16x32xf32>
    %264 = vector.extract_strided_slice %260 {offsets = [0, 96], sizes = [16, 32], strides = [1, 1]} : vector<16x128xf32> to vector<16x32xf32>
    %265 = arith.mulf %262, %246 : vector<16x32xf32>
    %266 = arith.mulf %261, %263 : vector<16x32xf32>
    %267 = arith.addf %265, %266 : vector<16x32xf32>
    %268 = math.tanh %267 : vector<16x32xf32>
    %269 = arith.mulf %264, %268 : vector<16x32xf32>
    %c3_i32_80 = arith.constant 3 : i32
    %c16_i32_81 = arith.constant 16 : i32
    %270 = arith.muli %c3_i32_80, %c16_i32_81 : i32
    %271 = tpu.assume_multiple %270, 16 : i32
    %272 = arith.index_cast %271 : i32 to index
    %c0_82 = arith.constant 0 : index
    %273 = vector.load %arg8[%272, %c0_82] : memref<128x128xf32, #tpu.memory_space<vmem>>, vector<16x128xf32>
    %c0_83 = arith.constant 0 : index
    %c0_84 = arith.constant 0 : index
    %274 = vector.load %arg3[%c0_83, %c0_84] : memref<32x128xf32, #tpu.memory_space<vmem>>, vector<32x128xf32>
    %cst_85 = arith.constant dense<0.000000e+00> : vector<16x128xf32>
    %275 = tpu.matmul %269, %274, %cst_85 {dimension_numbers = #tpu.dot_dimension_numbers<[1], [0], [0], [1], [0, 0, 1, 1], [], []>} : vector<16x32xf32>, vector<32x128xf32>, vector<16x128xf32> -> vector<16x128xf32>
    %276 = arith.addf %273, %275 : vector<16x128xf32>
    %277 = math.tanh %276 : vector<16x128xf32>
    %278 = vector.broadcast %8 : vector<1x128xf32> to vector<16x128xf32>
    %279 = arith.mulf %277, %278 : vector<16x128xf32>
    %280 = vector.broadcast %11 : vector<1x128xf32> to vector<16x128xf32>
    %281 = arith.addf %279, %280 : vector<16x128xf32>
    %282 = vector.extract_strided_slice %281 {offsets = [0, 0], sizes = [16, 32], strides = [1, 1]} : vector<16x128xf32> to vector<16x32xf32>
    %283 = vector.extract_strided_slice %281 {offsets = [0, 32], sizes = [16, 32], strides = [1, 1]} : vector<16x128xf32> to vector<16x32xf32>
    %284 = vector.extract_strided_slice %281 {offsets = [0, 64], sizes = [16, 32], strides = [1, 1]} : vector<16x128xf32> to vector<16x32xf32>
    %285 = vector.extract_strided_slice %281 {offsets = [0, 96], sizes = [16, 32], strides = [1, 1]} : vector<16x128xf32> to vector<16x32xf32>
    %286 = arith.mulf %283, %267 : vector<16x32xf32>
    %287 = arith.mulf %282, %284 : vector<16x32xf32>
    %288 = arith.addf %286, %287 : vector<16x32xf32>
    %289 = math.tanh %288 : vector<16x32xf32>
    %290 = arith.mulf %285, %289 : vector<16x32xf32>
    %c4_i32_86 = arith.constant 4 : i32
    %c16_i32_87 = arith.constant 16 : i32
    %291 = arith.muli %c4_i32_86, %c16_i32_87 : i32
    %292 = tpu.assume_multiple %291, 16 : i32
    %293 = arith.index_cast %292 : i32 to index
    %c0_88 = arith.constant 0 : index
    %294 = vector.load %arg8[%293, %c0_88] : memref<128x128xf32, #tpu.memory_space<vmem>>, vector<16x128xf32>
    %c0_89 = arith.constant 0 : index
    %c0_90 = arith.constant 0 : index
    %295 = vector.load %arg3[%c0_89, %c0_90] : memref<32x128xf32, #tpu.memory_space<vmem>>, vector<32x128xf32>
    %cst_91 = arith.constant dense<0.000000e+00> : vector<16x128xf32>
    %296 = tpu.matmul %290, %295, %cst_91 {dimension_numbers = #tpu.dot_dimension_numbers<[1], [0], [0], [1], [0, 0, 1, 1], [], []>} : vector<16x32xf32>, vector<32x128xf32>, vector<16x128xf32> -> vector<16x128xf32>
    %297 = arith.addf %294, %296 : vector<16x128xf32>
    %298 = math.tanh %297 : vector<16x128xf32>
    %299 = vector.broadcast %8 : vector<1x128xf32> to vector<16x128xf32>
    %300 = arith.mulf %298, %299 : vector<16x128xf32>
    %301 = vector.broadcast %11 : vector<1x128xf32> to vector<16x128xf32>
    %302 = arith.addf %300, %301 : vector<16x128xf32>
    %303 = vector.extract_strided_slice %302 {offsets = [0, 0], sizes = [16, 32], strides = [1, 1]} : vector<16x128xf32> to vector<16x32xf32>
    %304 = vector.extract_strided_slice %302 {offsets = [0, 32], sizes = [16, 32], strides = [1, 1]} : vector<16x128xf32> to vector<16x32xf32>
    %305 = vector.extract_strided_slice %302 {offsets = [0, 64], sizes = [16, 32], strides = [1, 1]} : vector<16x128xf32> to vector<16x32xf32>
    %306 = vector.extract_strided_slice %302 {offsets = [0, 96], sizes = [16, 32], strides = [1, 1]} : vector<16x128xf32> to vector<16x32xf32>
    %307 = arith.mulf %304, %288 : vector<16x32xf32>
    %308 = arith.mulf %303, %305 : vector<16x32xf32>
    %309 = arith.addf %307, %308 : vector<16x32xf32>
    %310 = math.tanh %309 : vector<16x32xf32>
    %311 = arith.mulf %306, %310 : vector<16x32xf32>
    %c5_i32_92 = arith.constant 5 : i32
    %c16_i32_93 = arith.constant 16 : i32
    %312 = arith.muli %c5_i32_92, %c16_i32_93 : i32
    %313 = tpu.assume_multiple %312, 16 : i32
    %314 = arith.index_cast %313 : i32 to index
    %c0_94 = arith.constant 0 : index
    %315 = vector.load %arg8[%314, %c0_94] : memref<128x128xf32, #tpu.memory_space<vmem>>, vector<16x128xf32>
    %c0_95 = arith.constant 0 : index
    %c0_96 = arith.constant 0 : index
    %316 = vector.load %arg3[%c0_95, %c0_96] : memref<32x128xf32, #tpu.memory_space<vmem>>, vector<32x128xf32>
    %cst_97 = arith.constant dense<0.000000e+00> : vector<16x128xf32>
    %317 = tpu.matmul %311, %316, %cst_97 {dimension_numbers = #tpu.dot_dimension_numbers<[1], [0], [0], [1], [0, 0, 1, 1], [], []>} : vector<16x32xf32>, vector<32x128xf32>, vector<16x128xf32> -> vector<16x128xf32>
    %318 = arith.addf %315, %317 : vector<16x128xf32>
    %319 = math.tanh %318 : vector<16x128xf32>
    %320 = vector.broadcast %8 : vector<1x128xf32> to vector<16x128xf32>
    %321 = arith.mulf %319, %320 : vector<16x128xf32>
    %322 = vector.broadcast %11 : vector<1x128xf32> to vector<16x128xf32>
    %323 = arith.addf %321, %322 : vector<16x128xf32>
    %324 = vector.extract_strided_slice %323 {offsets = [0, 0], sizes = [16, 32], strides = [1, 1]} : vector<16x128xf32> to vector<16x32xf32>
    %325 = vector.extract_strided_slice %323 {offsets = [0, 32], sizes = [16, 32], strides = [1, 1]} : vector<16x128xf32> to vector<16x32xf32>
    %326 = vector.extract_strided_slice %323 {offsets = [0, 64], sizes = [16, 32], strides = [1, 1]} : vector<16x128xf32> to vector<16x32xf32>
    %327 = vector.extract_strided_slice %323 {offsets = [0, 96], sizes = [16, 32], strides = [1, 1]} : vector<16x128xf32> to vector<16x32xf32>
    %328 = arith.mulf %325, %309 : vector<16x32xf32>
    %329 = arith.mulf %324, %326 : vector<16x32xf32>
    %330 = arith.addf %328, %329 : vector<16x32xf32>
    %331 = math.tanh %330 : vector<16x32xf32>
    %332 = arith.mulf %327, %331 : vector<16x32xf32>
    %c6_i32_98 = arith.constant 6 : i32
    %c16_i32_99 = arith.constant 16 : i32
    %333 = arith.muli %c6_i32_98, %c16_i32_99 : i32
    %334 = tpu.assume_multiple %333, 16 : i32
    %335 = arith.index_cast %334 : i32 to index
    %c0_100 = arith.constant 0 : index
    %336 = vector.load %arg8[%335, %c0_100] : memref<128x128xf32, #tpu.memory_space<vmem>>, vector<16x128xf32>
    %c0_101 = arith.constant 0 : index
    %c0_102 = arith.constant 0 : index
    %337 = vector.load %arg3[%c0_101, %c0_102] : memref<32x128xf32, #tpu.memory_space<vmem>>, vector<32x128xf32>
    %cst_103 = arith.constant dense<0.000000e+00> : vector<16x128xf32>
    %338 = tpu.matmul %332, %337, %cst_103 {dimension_numbers = #tpu.dot_dimension_numbers<[1], [0], [0], [1], [0, 0, 1, 1], [], []>} : vector<16x32xf32>, vector<32x128xf32>, vector<16x128xf32> -> vector<16x128xf32>
    %339 = arith.addf %336, %338 : vector<16x128xf32>
    %340 = math.tanh %339 : vector<16x128xf32>
    %341 = vector.broadcast %8 : vector<1x128xf32> to vector<16x128xf32>
    %342 = arith.mulf %340, %341 : vector<16x128xf32>
    %343 = vector.broadcast %11 : vector<1x128xf32> to vector<16x128xf32>
    %344 = arith.addf %342, %343 : vector<16x128xf32>
    %345 = vector.extract_strided_slice %344 {offsets = [0, 0], sizes = [16, 32], strides = [1, 1]} : vector<16x128xf32> to vector<16x32xf32>
    %346 = vector.extract_strided_slice %344 {offsets = [0, 32], sizes = [16, 32], strides = [1, 1]} : vector<16x128xf32> to vector<16x32xf32>
    %347 = vector.extract_strided_slice %344 {offsets = [0, 64], sizes = [16, 32], strides = [1, 1]} : vector<16x128xf32> to vector<16x32xf32>
    %348 = vector.extract_strided_slice %344 {offsets = [0, 96], sizes = [16, 32], strides = [1, 1]} : vector<16x128xf32> to vector<16x32xf32>
    %349 = arith.mulf %346, %330 : vector<16x32xf32>
    %350 = arith.mulf %345, %347 : vector<16x32xf32>
    %351 = arith.addf %349, %350 : vector<16x32xf32>
    %352 = math.tanh %351 : vector<16x32xf32>
    %353 = arith.mulf %348, %352 : vector<16x32xf32>
    %c7_i32_104 = arith.constant 7 : i32
    %c16_i32_105 = arith.constant 16 : i32
    %354 = arith.muli %c7_i32_104, %c16_i32_105 : i32
    %355 = tpu.assume_multiple %354, 16 : i32
    %356 = arith.index_cast %355 : i32 to index
    %c0_106 = arith.constant 0 : index
    %357 = vector.load %arg8[%356, %c0_106] : memref<128x128xf32, #tpu.memory_space<vmem>>, vector<16x128xf32>
    %c0_107 = arith.constant 0 : index
    %c0_108 = arith.constant 0 : index
    %358 = vector.load %arg3[%c0_107, %c0_108] : memref<32x128xf32, #tpu.memory_space<vmem>>, vector<32x128xf32>
    %cst_109 = arith.constant dense<0.000000e+00> : vector<16x128xf32>
    %359 = tpu.matmul %353, %358, %cst_109 {dimension_numbers = #tpu.dot_dimension_numbers<[1], [0], [0], [1], [0, 0, 1, 1], [], []>} : vector<16x32xf32>, vector<32x128xf32>, vector<16x128xf32> -> vector<16x128xf32>
    %360 = arith.addf %357, %359 : vector<16x128xf32>
    %361 = math.tanh %360 : vector<16x128xf32>
    %362 = vector.broadcast %8 : vector<1x128xf32> to vector<16x128xf32>
    %363 = arith.mulf %361, %362 : vector<16x128xf32>
    %364 = vector.broadcast %11 : vector<1x128xf32> to vector<16x128xf32>
    %365 = arith.addf %363, %364 : vector<16x128xf32>
    %366 = vector.extract_strided_slice %365 {offsets = [0, 0], sizes = [16, 32], strides = [1, 1]} : vector<16x128xf32> to vector<16x32xf32>
    %367 = vector.extract_strided_slice %365 {offsets = [0, 32], sizes = [16, 32], strides = [1, 1]} : vector<16x128xf32> to vector<16x32xf32>
    %368 = vector.extract_strided_slice %365 {offsets = [0, 64], sizes = [16, 32], strides = [1, 1]} : vector<16x128xf32> to vector<16x32xf32>
    %369 = vector.extract_strided_slice %365 {offsets = [0, 96], sizes = [16, 32], strides = [1, 1]} : vector<16x128xf32> to vector<16x32xf32>
    %370 = arith.mulf %367, %351 : vector<16x32xf32>
    %371 = arith.mulf %366, %368 : vector<16x32xf32>
    %372 = arith.addf %370, %371 : vector<16x32xf32>
    %373 = math.tanh %372 : vector<16x32xf32>
    %374 = arith.mulf %369, %373 : vector<16x32xf32>
    %c8_i32_110 = arith.constant 8 : i32
    %c0_111 = arith.constant 0 : index
    %c0_112 = arith.constant 0 : index
    %375 = vector.load %arg5[%c0_111, %c0_112] : memref<1x32xf32, #tpu.memory_space<vmem>>, vector<1x32xf32>
    %376 = vector.broadcast %375 : vector<1x32xf32> to vector<16x32xf32>
    %377 = arith.mulf %374, %376 : vector<16x32xf32>
    %cst_113 = arith.constant dense<0.000000e+00> : vector<16xf32>
    %378 = vector.multi_reduction <add>, %377, %cst_113 [1] : vector<16x32xf32> to vector<16xf32>
    %379 = vector.shape_cast %378 : vector<16xf32> to vector<16x1xf32>
    %c0_114 = arith.constant 0 : index
    %c0_115 = arith.constant 0 : index
    %380 = vector.load %arg6[%c0_114, %c0_115] : memref<1x1xf32, #tpu.memory_space<vmem>>, vector<1x1xf32>
    %381 = vector.broadcast %380 : vector<1x1xf32> to vector<16x1xf32>
    %382 = arith.addf %379, %381 : vector<16x1xf32>
    %c0_116 = arith.constant 0 : index
    %c0_117 = arith.constant 0 : index
    %383 = vector.load %arg7[%c0_116, %c0_117] : memref<16x1xf32, #tpu.memory_space<vmem>>, vector<16x1xf32>
    tpu.vector_store %arg7[%c0_116, %c0_117], %382 {strides = array<i32>} : memref<16x1xf32, #tpu.memory_space<vmem>>, vector<16x1xf32>,
    return
  }
}

</mosaic_0001>

<llo_original>
// kernel: lstm_forward.1
$region0: #{lstm_forward.1}
  #allocation0 [shape = 'u32[]', space=smem, size = 0x4, offset = 0x4, fixed_abs, tag = 'smem constant byte address 0x4 - core index']
  #allocation1 [shape = 'u32[144,128]{1,0:T(1,128)}', space=vmem, size = 0x12000, scoped, tag = 'internal scratch']
  #allocation2 [shape = 'f32[128,128]{1,0:T(8,128)}', space=vmem, size = 0x10000, scoped, tag = 'scratch operand']
  #allocation3 [shape = 'f32[128,32]{1,0:T(8,128)}', space=vmem, size = 0x10000, scoped, tag = 'scratch operand']
  #allocation4 [shape = 'f32[1,1]{1,0:T(1,128)S(1)}', space=vmem, size = 0x200, scoped, tag = 'scoped memory for lstm_forward.1']
  %s0 = inlined_call_operand.vmem [shape: f32[128,128], index: 0, kind: input, shape index: {}]
  %s1 = inlined_call_operand.vmem [shape: f32[32,128], index: 1, kind: input, shape index: {}]
  %s2 = inlined_call_operand.vmem [shape: f32[32,128], index: 2, kind: input, shape index: {}]
  %s3 = inlined_call_operand.vmem [shape: f32[32,128], index: 3, kind: input, shape index: {}]
  %s4 = inlined_call_operand.vmem [shape: f32[1,128], index: 4, kind: input, shape index: {}]
  %s5 = inlined_call_operand.vmem [shape: f32[1,32], index: 5, kind: input, shape index: {}]
  %s6 = inlined_call_operand.<no memory space> [shape: f32[1,1], index: 6, kind: input, shape index: {}]
  %s7 = inlined_call_operand.vmem [shape: f32[16,1], index: 7, kind: output, shape index: {}]
  %s8 = sld [smem:[#allocation0]]
  $region38: #{lstm_forward.1} parent=0
    _
  %s10 = ssub.s32 1, %s8
  %s11 = scalar_select 0, %s10, %s8
  %v12 = vstv %s6
  %13 = vst [vmem:[#allocation4] sm:$0x1] %v12
  // Predicated region
  $region2: #{lstm_forward.1} parent=0 // pred_check
    _
  $region3: #{lstm_forward.1} parent=0 // pred_check_branch
    %15 = sbr.rel (0) target = $region5
  $region4: #{lstm_forward.1} parent=0 // pred_region
    _
  $region5: #{lstm_forward.1} parent=0 // pred_fallthru
    _
  // Predicated region
  $region6: #{lstm_forward.1} parent=0 // pred_check
    _
  $region7: #{lstm_forward.1} parent=0 // pred_check_branch
    %17 = sbr.rel (0) target = $region9
  $region8: #{lstm_forward.1} parent=0 // pred_region
    _
  $region9: #{lstm_forward.1} parent=0 // pred_fallthru
    _
  // Predicated region
  $region10: #{lstm_forward.1} parent=0 // pred_check
    _
  $region11: #{lstm_forward.1} parent=0 // pred_check_branch
    %19 = sbr.rel (0) target = $region13
  $region12: #{lstm_forward.1} parent=0 // pred_region
    _
  $region13: #{lstm_forward.1} parent=0 // pred_fallthru
    _
  // Predicated region
  $region14: #{lstm_forward.1} parent=0 // pred_check
    _
  $region15: #{lstm_forward.1} parent=0 // pred_check_branch
    %21 = sbr.rel (0) target = $region17
  $region16: #{lstm_forward.1} parent=0 // pred_region
    _
  $region17: #{lstm_forward.1} parent=0 // pred_fallthru
    _
  // Predicated region
  $region18: #{lstm_forward.1} parent=0 // pred_check
    _
  $region19: #{lstm_forward.1} parent=0 // pred_check_branch
    %23 = sbr.rel (0) target = $region21
  $region20: #{lstm_forward.1} parent=0 // pred_region
    _
  $region21: #{lstm_forward.1} parent=0 // pred_fallthru
    _
  // Predicated region
  $region22: #{lstm_forward.1} parent=0 // pred_check
    _
  $region23: #{lstm_forward.1} parent=0 // pred_check_branch
    %25 = sbr.rel (0) target = $region25
  $region24: #{lstm_forward.1} parent=0 // pred_region
    _
  $region25: #{lstm_forward.1} parent=0 // pred_fallthru
    _
  // Predicated region
  $region26: #{lstm_forward.1} parent=0 // pred_check
    _
  $region27: #{lstm_forward.1} parent=0 // pred_check_branch
    %27 = sbr.rel (0) target = $region29
  $region28: #{lstm_forward.1} parent=0 // pred_region
    _
  $region29: #{lstm_forward.1} parent=0 // pred_fallthru
    _
  %v28 = vlaneseq
  %v29 = vand.u32 %v28, 127
  %vm30 = vcmp.ge.s32.totalorder %v29, 64
  %vm31 = vcmp.lt.s32.totalorder %v29, 96
  %vm32 = vmand %vm30, %vm31
  %v33 = vsel %vm32, 1.0, 0.5
  %v34 = vsel %vm32, 0.0, 0.5
  %v35 = vld [vmem:[%s0] sm:$0xff]
  %v36 = vld [vmem:[%s0 + $0x8] sm:$0xff]
  %v37 = vld [vmem:[%s1] sm:$0xff]
  %v38 = vld [vmem:[%s1 + $0x8] sm:$0xff]
  %v39 = vld [vmem:[%s1 + $0x10] sm:$0xff]
  %v40 = vld [vmem:[%s1 + $0x18] sm:$0xff]
  %vm41 = vcmask 261120
  %v43 = vsel %vm41, 0.0, 0
  %45 = vmatprep.subr.mxu0 0.0
  %46 = vmatpush1.msra.mxu0 0.0
  %47 = vmatprep.subr.mxu0 0.0
  %48 = vmatpush1.msra.mxu0 0.0
  %49 = vmatprep.subr.mxu0 0.0
  %50 = vmatpush1.msra.mxu0 0.0
  %51 = vmatprep.subr.mxu0 0.0
  %52 = vmatpush1.msra.mxu0 0.0
  %53 = vmatprep.subr.mxu0 0.0
  %54 = vmatpush1.msra.mxu0 0.0
  %55 = vmatprep.subr.mxu0 0.0
  %56 = vmatpush1.msra.mxu0 0.0
  %57 = vmatprep.subr.mxu0 0.0
  %58 = vmatpush1.msra.mxu0 0.0
  %59 = vmatprep.subr.mxu0 0.0
  %60 = vmatpush1.msra.mxu0 0.0
  %61 = vmatprep.subr.mxu0 0.0
  %62 = vmatpush1.msra.mxu0 0.0
  %63 = vmatprep.subr.mxu0 0.0
  %64 = vmatpush1.msra.mxu0 0.0
  %65 = vmatprep.subr.mxu0 0.0
  %66 = vmatpush1.msra.mxu0 0.0
  %67 = vmatprep.subr.mxu0 0.0
  %68 = vmatpush1.msra.mxu0 0.0
  %69 = vmatprep.subr.mxu0 0.0
  %70 = vmatpush1.msra.mxu0 %v40
  %71 = vmatprep.subr.mxu0 0.0
  %72 = vmatpush1.msra.mxu0 %v39
  %73 = vmatprep.subr.mxu0 0.0
  %74 = vmatpush1.msra.mxu0 %v38
  %75 = vmatprep.subr.mxu0 0.0
  %76 = vmatpush1.msra.mxu0 %v37
  %77 = vmatprep.subr.mxu0 0.0
  %78 = vmatpush2.msra.mxu0 0.0
  %79 = vmatprep.subr.mxu0 0.0
  %80 = vmatpush2.msra.mxu0 0.0
  %81 = vmatprep.subr.mxu0 0.0
  %82 = vmatpush2.msra.mxu0 0.0
  %83 = vmatprep.subr.mxu0 0.0
  %84 = vmatpush2.msra.mxu0 0.0
  %85 = vmatprep.subr.mxu0 0.0
  %86 = vmatpush2.msra.mxu0 0.0
  %87 = vmatprep.subr.mxu0 0.0
  %88 = vmatpush2.msra.mxu0 0.0
  %89 = vmatprep.subr.mxu0 0.0
  %90 = vmatpush2.msra.mxu0 0.0
  %91 = vmatprep.subr.mxu0 0.0
  %92 = vmatpush2.msra.mxu0 0.0
  %93 = vmatprep.subr.mxu0 0.0
  %94 = vmatpush2.msra.mxu0 0.0
  %95 = vmatprep.subr.mxu0 0.0
  %96 = vmatpush2.msra.mxu0 0.0
  %97 = vmatprep.subr.mxu0 0.0
  %98 = vmatpush2.msra.mxu0 0.0
  %99 = vmatprep.subr.mxu0 0.0
  %100 = vmatpush2.msra.mxu0 0.0
  %101 = vmatprep.subr.mxu0 0.0
  %102 = vmatpush2.msra.mxu0 0.0
  %103 = vmatprep.subr.mxu0 0.0
  %104 = vmatpush2.msra.mxu0 0.0
  %105 = vmatprep.subr.mxu0 0.0
  %106 = vmatpush2.msra.mxu0 0.0
  %107 = vmatprep.subr.mxu0 0.0
  %108 = vmatpush2.msra.mxu0 0.0
  %109 = vmatprep.mubr.f32.mxu0 0.0
  %110 = vmatmul.mubr.f32.gmra.mxu0 %v43
  %v111 = vpop.f32.mrf.mxu0
  %v112 = vadd.f32 0.0, %v111
  %v113 = vpop.f32.mrf.mxu0
  %114 = vmatprep.mubr.f32.mxu0 0.0
  %115 = vmatmul.mubr.f32.gmra.mxu0 %v43
  %v116 = vpop.f32.mrf.mxu0
  %v117 = vadd.f32 0.0, %v116
  %v118 = vpop.f32.mrf.mxu0
  %119 = vdwg.mxu0
  %v120 = vadd.f32 %v35, %v112
  %v121 = vadd.f32 %v36, %v117
  %v122 = vtanh.pop %v120
  %v123 = vtanh.pop %v121
  %v124 = vmul.f32 %v122, %v33
  %v125 = vmul.f32 %v123, %v33
  %v126 = vadd.f32 %v124, %v34
  %v127 = vadd.f32 %v125, %v34
  %v128 = vmul.f32 %v126, 0.0
  %v129 = vmul.f32 %v127, 0.0
  %132 = vrot.lane.b32.xlu0 %v126, 64
  %v133 = vpop.permute.xlu0 %132
  %134 = vrot.lane.b32.xlu0 %v127, 64
  %v135 = vpop.permute.xlu0 %134
  %v138 = vmul.f32 %v126, %v133
  %v139 = vmul.f32 %v127, %v135
  %142 = vrot.lane.b32.xlu0 %v138, 32
  %v143 = vpop.permute.xlu0 %142
  %144 = vrot.lane.b32.xlu0 %v139, 32
  %v145 = vpop.permute.xlu0 %144
  %v148 = vadd.f32 %v128, %v143
  %v149 = vadd.f32 %v129, %v145
  %v150 = vtanh.pop %v148
  %v151 = vtanh.pop %v149
  %154 = vrot.lane.b32.xlu0 %v150, 64
  %v155 = vpop.permute.xlu0 %154
  %156 = vrot.lane.b32.xlu0 %v151, 64
  %v157 = vpop.permute.xlu0 %156
  %v160 = vmul.f32 %v126, %v155
  %v161 = vmul.f32 %v127, %v157
  %164 = vrot.lane.b32.xlu0 %v160, 32
  %v165 = vpop.permute.xlu0 %164
  %166 = vrot.lane.b32.xlu0 %v161, 32
  %v167 = vpop.permute.xlu0 %166
  %170 = vst.msk [vmem:[#allocation3] sm:$0xff] %vm41, %v165
  %171 = vst.msk [vmem:[#allocation3 + $0x8] sm:$0xff] %vm41, %v167
  %s172 = scalar_lea.vmem %s0, 16
  %v173 = vld [vmem:[%s172] sm:$0xff]
  %v174 = vld [vmem:[%s172 + $0x8] sm:$0xff]
  %v175 = vld [vmem:[%s1] sm:$0xff]
  %v176 = vld [vmem:[%s1 + $0x8] sm:$0xff]
  %v177 = vld [vmem:[%s1 + $0x10] sm:$0xff]
  %v178 = vld [vmem:[%s1 + $0x18] sm:$0xff]
  %v179 = vsel %vm41, %v165, 0
  %v181 = vsel %vm41, %v167, 0
  %183 = vmatprep.subr.mxu0 0.0
  %184 = vmatpush1.msra.mxu0 0.0
  %185 = vmatprep.subr.mxu0 0.0
  %186 = vmatpush1.msra.mxu0 0.0
  %187 = vmatprep.subr.mxu0 0.0
  %188 = vmatpush1.msra.mxu0 0.0
  %189 = vmatprep.subr.mxu0 0.0
  %190 = vmatpush1.msra.mxu0 0.0
  %191 = vmatprep.subr.mxu0 0.0
  %192 = vmatpush1.msra.mxu0 0.0
  %193 = vmatprep.subr.mxu0 0.0
  %194 = vmatpush1.msra.mxu0 0.0
  %195 = vmatprep.subr.mxu0 0.0
  %196 = vmatpush1.msra.mxu0 0.0
  %197 = vmatprep.subr.mxu0 0.0
  %198 = vmatpush1.msra.mxu0 0.0
  %199 = vmatprep.subr.mxu0 0.0
  %200 = vmatpush1.msra.mxu0 0.0
  %201 = vmatprep.subr.mxu0 0.0
  %202 = vmatpush1.msra.mxu0 0.0
  %203 = vmatprep.subr.mxu0 0.0
  %204 = vmatpush1.msra.mxu0 0.0
  %205 = vmatprep.subr.mxu0 0.0
  %206 = vmatpush1.msra.mxu0 0.0
  %207 = vmatprep.subr.mxu0 0.0
  %208 = vmatpush1.msra.mxu0 %v178
  %209 = vmatprep.subr.mxu0 0.0
  %210 = vmatpush1.msra.mxu0 %v177
  %211 = vmatprep.subr.mxu0 0.0
  %212 = vmatpush1.msra.mxu0 %v176
  %213 = vmatprep.subr.mxu0 0.0
  %214 = vmatpush1.msra.mxu0 %v175
  %215 = vmatprep.subr.mxu0 0.0
  %216 = vmatpush2.msra.mxu0 0.0
  %217 = vmatprep.subr.mxu0 0.0
  %218 = vmatpush2.msra.mxu0 0.0
  %219 = vmatprep.subr.mxu0 0.0
  %220 = vmatpush2.msra.mxu0 0.0
  %221 = vmatprep.subr.mxu0 0.0
  %222 = vmatpush2.msra.mxu0 0.0
  %223 = vmatprep.subr.mxu0 0.0
  %224 = vmatpush2.msra.mxu0 0.0
  %225 = vmatprep.subr.mxu0 0.0
  %226 = vmatpush2.msra.mxu0 0.0
  %227 = vmatprep.subr.mxu0 0.0
  %228 = vmatpush2.msra.mxu0 0.0
  %229 = vmatprep.subr.mxu0 0.0
  %230 = vmatpush2.msra.mxu0 0.0
  %231 = vmatprep.subr.mxu0 0.0
  %232 = vmatpush2.msra.mxu0 0.0
  %233 = vmatprep.subr.mxu0 0.0
  %234 = vmatpush2.msra.mxu0 0.0
  %235 = vmatprep.subr.mxu0 0.0
  %236 = vmatpush2.msra.mxu0 0.0
  %237 = vmatprep.subr.mxu0 0.0
  %238 = vmatpush2.msra.mxu0 0.0
  %239 = vmatprep.subr.mxu0 0.0
  %240 = vmatpush2.msra.mxu0 0.0
  %241 = vmatprep.subr.mxu0 0.0
  %242 = vmatpush2.msra.mxu0 0.0
  %243 = vmatprep.subr.mxu0 0.0
  %244 = vmatpush2.msra.mxu0 0.0
  %245 = vmatprep.subr.mxu0 0.0
  %246 = vmatpush2.msra.mxu0 0.0
  %247 = vmatprep.mubr.f32.mxu0 0.0
  %248 = vmatmul.mubr.f32.gmra.mxu0 %v179
  %v249 = vpop.f32.mrf.mxu0
  %v250 = vadd.f32 0.0, %v249
  %v251 = vpop.f32.mrf.mxu0
  %252 = vmatprep.mubr.f32.mxu0 0.0
  %253 = vmatmul.mubr.f32.gmra.mxu0 %v181
  %v254 = vpop.f32.mrf.mxu0
  %v255 = vadd.f32 0.0, %v254
  %v256 = vpop.f32.mrf.mxu0
  %257 = vdwg.mxu0
  %v258 = vadd.f32 %v173, %v250
  %v259 = vadd.f32 %v174, %v255
  %v260 = vtanh.pop %v258
  %v261 = vtanh.pop %v259
  %v262 = vmul.f32 %v260, %v33
  %v263 = vmul.f32 %v261, %v33
  %v264 = vadd.f32 %v262, %v34
  %v265 = vadd.f32 %v263, %v34
  %v266 = vmul.f32 %v264, %v148
  %v267 = vmul.f32 %v265, %v149
  %270 = vrot.lane.b32.xlu0 %v264, 64
  %v271 = vpop.permute.xlu0 %270
  %272 = vrot.lane.b32.xlu0 %v265, 64
  %v273 = vpop.permute.xlu0 %272
  %v276 = vmul.f32 %v264, %v271
  %v277 = vmul.f32 %v265, %v273
  %280 = vrot.lane.b32.xlu0 %v276, 32
  %v281 = vpop.permute.xlu0 %280
  %282 = vrot.lane.b32.xlu0 %v277, 32
  %v283 = vpop.permute.xlu0 %282
  %v286 = vadd.f32 %v266, %v281
  %v287 = vadd.f32 %v267, %v283
  %v288 = vtanh.pop %v286
  %v289 = vtanh.pop %v287
  %292 = vrot.lane.b32.xlu0 %v288, 64
  %v293 = vpop.permute.xlu0 %292
  %294 = vrot.lane.b32.xlu0 %v289, 64
  %v295 = vpop.permute.xlu0 %294
  %v298 = vmul.f32 %v264, %v293
  %v299 = vmul.f32 %v265, %v295
  %302 = vrot.lane.b32.xlu0 %v298, 32
  %v303 = vpop.permute.xlu0 %302
  %304 = vrot.lane.b32.xlu0 %v299, 32
  %v305 = vpop.permute.xlu0 %304
  %s308 = scalar_lea.vmem [#allocation3], 16
  %309 = vst.msk [vmem:[%s308] sm:$0xff] %vm41, %v303
  %310 = vst.msk [vmem:[%s308 + $0x8] sm:$0xff] %vm41, %v305
  %s311 = scalar_lea.vmem %s0, 32
  %v312 = vld [vmem:[%s311] sm:$0xff]
  %v313 = vld [vmem:[%s311 + $0x8] sm:$0xff]
  %v314 = vld [vmem:[%s1] sm:$0xff]
  %v315 = vld [vmem:[%s1 + $0x8] sm:$0xff]
  %v316 = vld [vmem:[%s1 + $0x10] sm:$0xff]
  %v317 = vld [vmem:[%s1 + $0x18] sm:$0xff]
  %v318 = vsel %vm41, %v303, 0
  %v320 = vsel %vm41, %v305, 0
  %322 = vmatprep.subr.mxu0 0.0
  %323 = vmatpush1.msra.mxu0 0.0
  %324 = vmatprep.subr.mxu0 0.0
  %325 = vmatpush1.msra.mxu0 0.0
  %326 = vmatprep.subr.mxu0 0.0
  %327 = vmatpush1.msra.mxu0 0.0
  %328 = vmatprep.subr.mxu0 0.0
  %329 = vmatpush1.msra.mxu0 0.0
  %330 = vmatprep.subr.mxu0 0.0
  %331 = vmatpush1.msra.mxu0 0.0
  %332 = vmatprep.subr.mxu0 0.0
  %333 = vmatpush1.msra.mxu0 0.0
  %334 = vmatprep.subr.mxu0 0.0
  %335 = vmatpush1.msra.mxu0 0.0
  %336 = vmatprep.subr.mxu0 0.0
  %337 = vmatpush1.msra.mxu0 0.0
  %338 = vmatprep.subr.mxu0 0.0
  %339 = vmatpush1.msra.mxu0 0.0
  %340 = vmatprep.subr.mxu0 0.0
  %341 = vmatpush1.msra.mxu0 0.0
  %342 = vmatprep.subr.mxu0 0.0
  %343 = vmatpush1.msra.mxu0 0.0
  %344 = vmatprep.subr.mxu0 0.0
  %345 = vmatpush1.msra.mxu0 0.0
  %346 = vmatprep.subr.mxu0 0.0
  %347 = vmatpush1.msra.mxu0 %v317
  %348 = vmatprep.subr.mxu0 0.0
  %349 = vmatpush1.msra.mxu0 %v316
  %350 = vmatprep.subr.mxu0 0.0
  %351 = vmatpush1.msra.mxu0 %v315
  %352 = vmatprep.subr.mxu0 0.0
  %353 = vmatpush1.msra.mxu0 %v314
  %354 = vmatprep.subr.mxu0 0.0
  %355 = vmatpush2.msra.mxu0 0.0
  %356 = vmatprep.subr.mxu0 0.0
  %357 = vmatpush2.msra.mxu0 0.0
  %358 = vmatprep.subr.mxu0 0.0
  %359 = vmatpush2.msra.mxu0 0.0
  %360 = vmatprep.subr.mxu0 0.0
  %361 = vmatpush2.msra.mxu0 0.0
  %362 = vmatprep.subr.mxu0 0.0
  %363 = vmatpush2.msra.mxu0 0.0
  %364 = vmatprep.subr.mxu0 0.0
  %365 = vmatpush2.msra.mxu0 0.0
  %366 = vmatprep.subr.mxu0 0.0
  %367 = vmatpush2.msra.mxu0 0.0
  %368 = vmatprep.subr.mxu0 0.0
  %369 = vmatpush2.msra.mxu0 0.0
  %370 = vmatprep.subr.mxu0 0.0
  %371 = vmatpush2.msra.mxu0 0.0
  %372 = vmatprep.subr.mxu0 0.0
  %373 = vmatpush2.msra.mxu0 0.0
  %374 = vmatprep.subr.mxu0 0.0
  %375 = vmatpush2.msra.mxu0 0.0
  %376 = vmatprep.subr.mxu0 0.0
  %377 = vmatpush2.msra.mxu0 0.0
  %378 = vmatprep.subr.mxu0 0.0
  %379 = vmatpush2.msra.mxu0 0.0
  %380 = vmatprep.subr.mxu0 0.0
  %381 = vmatpush2.msra.mxu0 0.0
  %382 = vmatprep.subr.mxu0 0.0
  %383 = vmatpush2.msra.mxu0 0.0
  %384 = vmatprep.subr.mxu0 0.0
  %385 = vmatpush2.msra.mxu0 0.0
  %386 = vmatprep.mubr.f32.mxu0 0.0
  %387 = vmatmul.mubr.f32.gmra.mxu0 %v318
  %v388 = vpop.f32.mrf.mxu0
  %v389 = vadd.f32 0.0, %v388
  %v390 = vpop.f32.mrf.mxu0
  %391 = vmatprep.mubr.f32.mxu0 0.0
  %392 = vmatmul.mubr.f32.gmra.mxu0 %v320
  %v393 = vpop.f32.mrf.mxu0
  %v394 = vadd.f32 0.0, %v393
  %v395 = vpop.f32.mrf.mxu0
  %396 = vdwg.mxu0
  %v397 = vadd.f32 %v312, %v389
  %v398 = vadd.f32 %v313, %v394
  %v399 = vtanh.pop %v397
  %v400 = vtanh.pop %v398
  %v401 = vmul.f32 %v399, %v33
  %v402 = vmul.f32 %v400, %v33
  %v403 = vadd.f32 %v401, %v34
  %v404 = vadd.f32 %v402, %v34
  %v405 = vmul.f32 %v403, %v286
  %v406 = vmul.f32 %v404, %v287
  %409 = vrot.lane.b32.xlu0 %v403, 64
  %v410 = vpop.permute.xlu0 %409
  %411 = vrot.lane.b32.xlu0 %v404, 64
  %v412 = vpop.permute.xlu0 %411
  %v415 = vmul.f32 %v403, %v410
  %v416 = vmul.f32 %v404, %v412
  %419 = vrot.lane.b32.xlu0 %v415, 32
  %v420 = vpop.permute.xlu0 %419
  %421 = vrot.lane.b32.xlu0 %v416, 32
  %v422 = vpop.permute.xlu0 %421
  %v425 = vadd.f32 %v405, %v420
  %v426 = vadd.f32 %v406, %v422
  %v427 = vtanh.pop %v425
  %v428 = vtanh.pop %v426
  %431 = vrot.lane.b32.xlu0 %v427, 64
  %v432 = vpop.permute.xlu0 %431
  %433 = vrot.lane.b32.xlu0 %v428, 64
  %v434 = vpop.permute.xlu0 %433
  %v437 = vmul.f32 %v403, %v432
  %v438 = vmul.f32 %v404, %v434
  %441 = vrot.lane.b32.xlu0 %v437, 32
  %v442 = vpop.permute.xlu0 %441
  %443 = vrot.lane.b32.xlu0 %v438, 32
  %v444 = vpop.permute.xlu0 %443
  %s447 = scalar_lea.vmem [#allocation3], 32
  %448 = vst.msk [vmem:[%s447] sm:$0xff] %vm41, %v442
  %449 = vst.msk [vmem:[%s447 + $0x8] sm:$0xff] %vm41, %v444
  %s450 = scalar_lea.vmem %s0, 48
  %v451 = vld [vmem:[%s450] sm:$0xff]
  %v452 = vld [vmem:[%s450 + $0x8] sm:$0xff]
  %v453 = vld [vmem:[%s1] sm:$0xff]
  %v454 = vld [vmem:[%s1 + $0x8] sm:$0xff]
  %v455 = vld [vmem:[%s1 + $0x10] sm:$0xff]
  %v456 = vld [vmem:[%s1 + $0x18] sm:$0xff]
  %v457 = vsel %vm41, %v442, 0
  %v459 = vsel %vm41, %v444, 0
  %461 = vmatprep.subr.mxu0 0.0
  %462 = vmatpush1.msra.mxu0 0.0
  %463 = vmatprep.subr.mxu0 0.0
  %464 = vmatpush1.msra.mxu0 0.0
  %465 = vmatprep.subr.mxu0 0.0
  %466 = vmatpush1.msra.mxu0 0.0
  %467 = vmatprep.subr.mxu0 0.0
  %468 = vmatpush1.msra.mxu0 0.0
  %469 = vmatprep.subr.mxu0 0.0
  %470 = vmatpush1.msra.mxu0 0.0
  %471 = vmatprep.subr.mxu0 0.0
  %472 = vmatpush1.msra.mxu0 0.0
  %473 = vmatprep.subr.mxu0 0.0
  %474 = vmatpush1.msra.mxu0 0.0
  %475 = vmatprep.subr.mxu0 0.0
  %476 = vmatpush1.msra.mxu0 0.0
  %477 = vmatprep.subr.mxu0 0.0
  %478 = vmatpush1.msra.mxu0 0.0
  %479 = vmatprep.subr.mxu0 0.0
  %480 = vmatpush1.msra.mxu0 0.0
  %481 = vmatprep.subr.mxu0 0.0
  %482 = vmatpush1.msra.mxu0 0.0
  %483 = vmatprep.subr.mxu0 0.0
  %484 = vmatpush1.msra.mxu0 0.0
  %485 = vmatprep.subr.mxu0 0.0
  %486 = vmatpush1.msra.mxu0 %v456
  %487 = vmatprep.subr.mxu0 0.0
  %488 = vmatpush1.msra.mxu0 %v455
  %489 = vmatprep.subr.mxu0 0.0
  %490 = vmatpush1.msra.mxu0 %v454
  %491 = vmatprep.subr.mxu0 0.0
  %492 = vmatpush1.msra.mxu0 %v453
  %493 = vmatprep.subr.mxu0 0.0
  %494 = vmatpush2.msra.mxu0 0.0
  %495 = vmatprep.subr.mxu0 0.0
  %496 = vmatpush2.msra.mxu0 0.0
  %497 = vmatprep.subr.mxu0 0.0
  %498 = vmatpush2.msra.mxu0 0.0
  %499 = vmatprep.subr.mxu0 0.0
  %500 = vmatpush2.msra.mxu0 0.0
  %501 = vmatprep.subr.mxu0 0.0
  %502 = vmatpush2.msra.mxu0 0.0
  %503 = vmatprep.subr.mxu0 0.0
  %504 = vmatpush2.msra.mxu0 0.0
  %505 = vmatprep.subr.mxu0 0.0
  %506 = vmatpush2.msra.mxu0 0.0
  %507 = vmatprep.subr.mxu0 0.0
  %508 = vmatpush2.msra.mxu0 0.0
  %509 = vmatprep.subr.mxu0 0.0
  %510 = vmatpush2.msra.mxu0 0.0
  %511 = vmatprep.subr.mxu0 0.0
  %512 = vmatpush2.msra.mxu0 0.0
  %513 = vmatprep.subr.mxu0 0.0
  %514 = vmatpush2.msra.mxu0 0.0
  %515 = vmatprep.subr.mxu0 0.0
  %516 = vmatpush2.msra.mxu0 0.0
  %517 = vmatprep.subr.mxu0 0.0
  %518 = vmatpush2.msra.mxu0 0.0
  %519 = vmatprep.subr.mxu0 0.0
  %520 = vmatpush2.msra.mxu0 0.0
  %521 = vmatprep.subr.mxu0 0.0
  %522 = vmatpush2.msra.mxu0 0.0
  %523 = vmatprep.subr.mxu0 0.0
  %524 = vmatpush2.msra.mxu0 0.0
  %525 = vmatprep.mubr.f32.mxu0 0.0
  %526 = vmatmul.mubr.f32.gmra.mxu0 %v457
  %v527 = vpop.f32.mrf.mxu0
  %v528 = vadd.f32 0.0, %v527
  %v529 = vpop.f32.mrf.mxu0
  %530 = vmatprep.mubr.f32.mxu0 0.0
  %531 = vmatmul.mubr.f32.gmra.mxu0 %v459
  %v532 = vpop.f32.mrf.mxu0
  %v533 = vadd.f32 0.0, %v532
  %v534 = vpop.f32.mrf.mxu0
  %535 = vdwg.mxu0
  %v536 = vadd.f32 %v451, %v528
  %v537 = vadd.f32 %v452, %v533
  %v538 = vtanh.pop %v536
  %v539 = vtanh.pop %v537
  %v540 = vmul.f32 %v538, %v33
  %v541 = vmul.f32 %v539, %v33
  %v542 = vadd.f32 %v540, %v34
  %v543 = vadd.f32 %v541, %v34
  %v544 = vmul.f32 %v542, %v425
  %v545 = vmul.f32 %v543, %v426
  %548 = vrot.lane.b32.xlu0 %v542, 64
  %v549 = vpop.permute.xlu0 %548
  %550 = vrot.lane.b32.xlu0 %v543, 64
  %v551 = vpop.permute.xlu0 %550
  %v554 = vmul.f32 %v542, %v549
  %v555 = vmul.f32 %v543, %v551
  %558 = vrot.lane.b32.xlu0 %v554, 32
  %v559 = vpop.permute.xlu0 %558
  %560 = vrot.lane.b32.xlu0 %v555, 32
  %v561 = vpop.permute.xlu0 %560
  %v564 = vadd.f32 %v544, %v559
  %v565 = vadd.f32 %v545, %v561
  %v566 = vtanh.pop %v564
  %v567 = vtanh.pop %v565
  %570 = vrot.lane.b32.xlu0 %v566, 64
  %v571 = vpop.permute.xlu0 %570
  %572 = vrot.lane.b32.xlu0 %v567, 64
  %v573 = vpop.permute.xlu0 %572
  %v576 = vmul.f32 %v542, %v571
  %v577 = vmul.f32 %v543, %v573
  %580 = vrot.lane.b32.xlu0 %v576, 32
  %v581 = vpop.permute.xlu0 %580
  %582 = vrot.lane.b32.xlu0 %v577, 32
  %v583 = vpop.permute.xlu0 %582
  %s586 = scalar_lea.vmem [#allocation3], 48
  %587 = vst.msk [vmem:[%s586] sm:$0xff] %vm41, %v581
  %588 = vst.msk [vmem:[%s586 + $0x8] sm:$0xff] %vm41, %v583
  %s589 = scalar_lea.vmem %s0, 64
  %v590 = vld [vmem:[%s589] sm:$0xff]
  %v591 = vld [vmem:[%s589 + $0x8] sm:$0xff]
  %v592 = vld [vmem:[%s1] sm:$0xff]
  %v593 = vld [vmem:[%s1 + $0x8] sm:$0xff]
  %v594 = vld [vmem:[%s1 + $0x10] sm:$0xff]
  %v595 = vld [vmem:[%s1 + $0x18] sm:$0xff]
  %v596 = vsel %vm41, %v581, 0
  %v598 = vsel %vm41, %v583, 0
  %600 = vmatprep.subr.mxu0 0.0
  %601 = vmatpush1.msra.mxu0 0.0
  %602 = vmatprep.subr.mxu0 0.0
  %603 = vmatpush1.msra.mxu0 0.0
  %604 = vmatprep.subr.mxu0 0.0
  %605 = vmatpush1.msra.mxu0 0.0
  %606 = vmatprep.subr.mxu0 0.0
  %607 = vmatpush1.msra.mxu0 0.0
  %608 = vmatprep.subr.mxu0 0.0
  %609 = vmatpush1.msra.mxu0 0.0
  %610 = vmatprep.subr.mxu0 0.0
  %611 = vmatpush1.msra.mxu0 0.0
  %612 = vmatprep.subr.mxu0 0.0
  %613 = vmatpush1.msra.mxu0 0.0
  %614 = vmatprep.subr.mxu0 0.0
  %615 = vmatpush1.msra.mxu0 0.0
  %616 = vmatprep.subr.mxu0 0.0
  %617 = vmatpush1.msra.mxu0 0.0
  %618 = vmatprep.subr.mxu0 0.0
  %619 = vmatpush1.msra.mxu0 0.0
  %620 = vmatprep.subr.mxu0 0.0
  %621 = vmatpush1.msra.mxu0 0.0
  %622 = vmatprep.subr.mxu0 0.0
  %623 = vmatpush1.msra.mxu0 0.0
  %624 = vmatprep.subr.mxu0 0.0
  %625 = vmatpush1.msra.mxu0 %v595
  %626 = vmatprep.subr.mxu0 0.0
  %627 = vmatpush1.msra.mxu0 %v594
  %628 = vmatprep.subr.mxu0 0.0
  %629 = vmatpush1.msra.mxu0 %v593
  %630 = vmatprep.subr.mxu0 0.0
  %631 = vmatpush1.msra.mxu0 %v592
  %632 = vmatprep.subr.mxu0 0.0
  %633 = vmatpush2.msra.mxu0 0.0
  %634 = vmatprep.subr.mxu0 0.0
  %635 = vmatpush2.msra.mxu0 0.0
  %636 = vmatprep.subr.mxu0 0.0
  %637 = vmatpush2.msra.mxu0 0.0
  %638 = vmatprep.subr.mxu0 0.0
  %639 = vmatpush2.msra.mxu0 0.0
  %640 = vmatprep.subr.mxu0 0.0
  %641 = vmatpush2.msra.mxu0 0.0
  %642 = vmatprep.subr.mxu0 0.0
  %643 = vmatpush2.msra.mxu0 0.0
  %644 = vmatprep.subr.mxu0 0.0
  %645 = vmatpush2.msra.mxu0 0.0
  %646 = vmatprep.subr.mxu0 0.0
  %647 = vmatpush2.msra.mxu0 0.0
  %648 = vmatprep.subr.mxu0 0.0
  %649 = vmatpush2.msra.mxu0 0.0
  %650 = vmatprep.subr.mxu0 0.0
  %651 = vmatpush2.msra.mxu0 0.0
  %652 = vmatprep.subr.mxu0 0.0
  %653 = vmatpush2.msra.mxu0 0.0
  %654 = vmatprep.subr.mxu0 0.0
  %655 = vmatpush2.msra.mxu0 0.0
  %656 = vmatprep.subr.mxu0 0.0
  %657 = vmatpush2.msra.mxu0 0.0
  %658 = vmatprep.subr.mxu0 0.0
  %659 = vmatpush2.msra.mxu0 0.0
  %660 = vmatprep.subr.mxu0 0.0
  %661 = vmatpush2.msra.mxu0 0.0
  %662 = vmatprep.subr.mxu0 0.0
  %663 = vmatpush2.msra.mxu0 0.0
  %664 = vmatprep.mubr.f32.mxu0 0.0
  %665 = vmatmul.mubr.f32.gmra.mxu0 %v596
  %v666 = vpop.f32.mrf.mxu0
  %v667 = vadd.f32 0.0, %v666
  %v668 = vpop.f32.mrf.mxu0
  %669 = vmatprep.mubr.f32.mxu0 0.0
  %670 = vmatmul.mubr.f32.gmra.mxu0 %v598
  %v671 = vpop.f32.mrf.mxu0
  %v672 = vadd.f32 0.0, %v671
  %v673 = vpop.f32.mrf.mxu0
  %674 = vdwg.mxu0
  %v675 = vadd.f32 %v590, %v667
  %v676 = vadd.f32 %v591, %v672
  %v677 = vtanh.pop %v675
  %v678 = vtanh.pop %v676
  %v679 = vmul.f32 %v677, %v33
  %v680 = vmul.f32 %v678, %v33
  %v681 = vadd.f32 %v679, %v34
  %v682 = vadd.f32 %v680, %v34
  %v683 = vmul.f32 %v681, %v564
  %v684 = vmul.f32 %v682, %v565
  %687 = vrot.lane.b32.xlu0 %v681, 64
  %v688 = vpop.permute.xlu0 %687
  %689 = vrot.lane.b32.xlu0 %v682, 64
  %v690 = vpop.permute.xlu0 %689
  %v693 = vmul.f32 %v681, %v688
  %v694 = vmul.f32 %v682, %v690
  %697 = vrot.lane.b32.xlu0 %v693, 32
  %v698 = vpop.permute.xlu0 %697
  %699 = vrot.lane.b32.xlu0 %v694, 32
  %v700 = vpop.permute.xlu0 %699
  %v703 = vadd.f32 %v683, %v698
  %v704 = vadd.f32 %v684, %v700
  %v705 = vtanh.pop %v703
  %v706 = vtanh.pop %v704
  %709 = vrot.lane.b32.xlu0 %v705, 64
  %v710 = vpop.permute.xlu0 %709
  %711 = vrot.lane.b32.xlu0 %v706, 64
  %v712 = vpop.permute.xlu0 %711
  %v715 = vmul.f32 %v681, %v710
  %v716 = vmul.f32 %v682, %v712
  %719 = vrot.lane.b32.xlu0 %v715, 32
  %v720 = vpop.permute.xlu0 %719
  %721 = vrot.lane.b32.xlu0 %v716, 32
  %v722 = vpop.permute.xlu0 %721
  %s725 = scalar_lea.vmem [#allocation3], 64
  %726 = vst.msk [vmem:[%s725] sm:$0xff] %vm41, %v720
  %727 = vst.msk [vmem:[%s725 + $0x8] sm:$0xff] %vm41, %v722
  %s728 = scalar_lea.vmem %s0, 80
  %v729 = vld [vmem:[%s728] sm:$0xff]
  %v730 = vld [vmem:[%s728 + $0x8] sm:$0xff]
  %v731 = vld [vmem:[%s1] sm:$0xff]
  %v732 = vld [vmem:[%s1 + $0x8] sm:$0xff]
  %v733 = vld [vmem:[%s1 + $0x10] sm:$0xff]
  %v734 = vld [vmem:[%s1 + $0x18] sm:$0xff]
  %v735 = vsel %vm41, %v720, 0
  %v737 = vsel %vm41, %v722, 0
  %739 = vmatprep.subr.mxu0 0.0
  %740 = vmatpush1.msra.mxu0 0.0
  %741 = vmatprep.subr.mxu0 0.0
  %742 = vmatpush1.msra.mxu0 0.0
  %743 = vmatprep.subr.mxu0 0.0
  %744 = vmatpush1.msra.mxu0 0.0
  %745 = vmatprep.subr.mxu0 0.0
  %746 = vmatpush1.msra.mxu0 0.0
  %747 = vmatprep.subr.mxu0 0.0
  %748 = vmatpush1.msra.mxu0 0.0
  %749 = vmatprep.subr.mxu0 0.0
  %750 = vmatpush1.msra.mxu0 0.0
  %751 = vmatprep.subr.mxu0 0.0
  %752 = vmatpush1.msra.mxu0 0.0
  %753 = vmatprep.subr.mxu0 0.0
  %754 = vmatpush1.msra.mxu0 0.0
  %755 = vmatprep.subr.mxu0 0.0
  %756 = vmatpush1.msra.mxu0 0.0
  %757 = vmatprep.subr.mxu0 0.0
  %758 = vmatpush1.msra.mxu0 0.0
  %759 = vmatprep.subr.mxu0 0.0
  %760 = vmatpush1.msra.mxu0 0.0
  %761 = vmatprep.subr.mxu0 0.0
  %762 = vmatpush1.msra.mxu0 0.0
  %763 = vmatprep.subr.mxu0 0.0
  %764 = vmatpush1.msra.mxu0 %v734
  %765 = vmatprep.subr.mxu0 0.0
  %766 = vmatpush1.msra.mxu0 %v733
  %767 = vmatprep.subr.mxu0 0.0
  %768 = vmatpush1.msra.mxu0 %v732
  %769 = vmatprep.subr.mxu0 0.0
  %770 = vmatpush1.msra.mxu0 %v731
  %771 = vmatprep.subr.mxu0 0.0
  %772 = vmatpush2.msra.mxu0 0.0
  %773 = vmatprep.subr.mxu0 0.0
  %774 = vmatpush2.msra.mxu0 0.0
  %775 = vmatprep.subr.mxu0 0.0
  %776 = vmatpush2.msra.mxu0 0.0
  %777 = vmatprep.subr.mxu0 0.0
  %778 = vmatpush2.msra.mxu0 0.0
  %779 = vmatprep.subr.mxu0 0.0
  %780 = vmatpush2.msra.mxu0 0.0
  %781 = vmatprep.subr.mxu0 0.0
  %782 = vmatpush2.msra.mxu0 0.0
  %783 = vmatprep.subr.mxu0 0.0
  %784 = vmatpush2.msra.mxu0 0.0
  %785 = vmatprep.subr.mxu0 0.0
  %786 = vmatpush2.msra.mxu0 0.0
  %787 = vmatprep.subr.mxu0 0.0
  %788 = vmatpush2.msra.mxu0 0.0
  %789 = vmatprep.subr.mxu0 0.0
  %790 = vmatpush2.msra.mxu0 0.0
  %791 = vmatprep.subr.mxu0 0.0
  %792 = vmatpush2.msra.mxu0 0.0
  %793 = vmatprep.subr.mxu0 0.0
  %794 = vmatpush2.msra.mxu0 0.0
  %795 = vmatprep.subr.mxu0 0.0
  %796 = vmatpush2.msra.mxu0 0.0
  %797 = vmatprep.subr.mxu0 0.0
  %798 = vmatpush2.msra.mxu0 0.0
  %799 = vmatprep.subr.mxu0 0.0
  %800 = vmatpush2.msra.mxu0 0.0
  %801 = vmatprep.subr.mxu0 0.0
  %802 = vmatpush2.msra.mxu0 0.0
  %803 = vmatprep.mubr.f32.mxu0 0.0
  %804 = vmatmul.mubr.f32.gmra.mxu0 %v735
  %v805 = vpop.f32.mrf.mxu0
  %v806 = vadd.f32 0.0, %v805
  %v807 = vpop.f32.mrf.mxu0
  %808 = vmatprep.mubr.f32.mxu0 0.0
  %809 = vmatmul.mubr.f32.gmra.mxu0 %v737
  %v810 = vpop.f32.mrf.mxu0
  %v811 = vadd.f32 0.0, %v810
  %v812 = vpop.f32.mrf.mxu0
  %813 = vdwg.mxu0
  %v814 = vadd.f32 %v729, %v806
  %v815 = vadd.f32 %v730, %v811
  %v816 = vtanh.pop %v814
  %v817 = vtanh.pop %v815
  %v818 = vmul.f32 %v816, %v33
  %v819 = vmul.f32 %v817, %v33
  %v820 = vadd.f32 %v818, %v34
  %v821 = vadd.f32 %v819, %v34
  %v822 = vmul.f32 %v820, %v703
  %v823 = vmul.f32 %v821, %v704
  %826 = vrot.lane.b32.xlu0 %v820, 64
  %v827 = vpop.permute.xlu0 %826
  %828 = vrot.lane.b32.xlu0 %v821, 64
  %v829 = vpop.permute.xlu0 %828
  %v832 = vmul.f32 %v820, %v827
  %v833 = vmul.f32 %v821, %v829
  %836 = vrot.lane.b32.xlu0 %v832, 32
  %v837 = vpop.permute.xlu0 %836
  %838 = vrot.lane.b32.xlu0 %v833, 32
  %v839 = vpop.permute.xlu0 %838
  %v842 = vadd.f32 %v822, %v837
  %v843 = vadd.f32 %v823, %v839
  %v844 = vtanh.pop %v842
  %v845 = vtanh.pop %v843
  %848 = vrot.lane.b32.xlu0 %v844, 64
  %v849 = vpop.permute.xlu0 %848
  %850 = vrot.lane.b32.xlu0 %v845, 64
  %v851 = vpop.permute.xlu0 %850
  %v854 = vmul.f32 %v820, %v849
  %v855 = vmul.f32 %v821, %v851
  %858 = vrot.lane.b32.xlu0 %v854, 32
  %v859 = vpop.permute.xlu0 %858
  %860 = vrot.lane.b32.xlu0 %v855, 32
  %v861 = vpop.permute.xlu0 %860
  %s864 = scalar_lea.vmem [#allocation3], 80
  %865 = vst.msk [vmem:[%s864] sm:$0xff] %vm41, %v859
  %866 = vst.msk [vmem:[%s864 + $0x8] sm:$0xff] %vm41, %v861
  %s867 = scalar_lea.vmem %s0, 96
  %v868 = vld [vmem:[%s867] sm:$0xff]
  %v869 = vld [vmem:[%s867 + $0x8] sm:$0xff]
  %v870 = vld [vmem:[%s1] sm:$0xff]
  %v871 = vld [vmem:[%s1 + $0x8] sm:$0xff]
  %v872 = vld [vmem:[%s1 + $0x10] sm:$0xff]
  %v873 = vld [vmem:[%s1 + $0x18] sm:$0xff]
  %v874 = vsel %vm41, %v859, 0
  %v876 = vsel %vm41, %v861, 0
  %878 = vmatprep.subr.mxu0 0.0
  %879 = vmatpush1.msra.mxu0 0.0
  %880 = vmatprep.subr.mxu0 0.0
  %881 = vmatpush1.msra.mxu0 0.0
  %882 = vmatprep.subr.mxu0 0.0
  %883 = vmatpush1.msra.mxu0 0.0
  %884 = vmatprep.subr.mxu0 0.0
  %885 = vmatpush1.msra.mxu0 0.0
  %886 = vmatprep.subr.mxu0 0.0
  %887 = vmatpush1.msra.mxu0 0.0
  %888 = vmatprep.subr.mxu0 0.0
  %889 = vmatpush1.msra.mxu0 0.0
  %890 = vmatprep.subr.mxu0 0.0
  %891 = vmatpush1.msra.mxu0 0.0
  %892 = vmatprep.subr.mxu0 0.0
  %893 = vmatpush1.msra.mxu0 0.0
  %894 = vmatprep.subr.mxu0 0.0
  %895 = vmatpush1.msra.mxu0 0.0
  %896 = vmatprep.subr.mxu0 0.0
  %897 = vmatpush1.msra.mxu0 0.0
  %898 = vmatprep.subr.mxu0 0.0
  %899 = vmatpush1.msra.mxu0 0.0
  %900 = vmatprep.subr.mxu0 0.0
  %901 = vmatpush1.msra.mxu0 0.0
  %902 = vmatprep.subr.mxu0 0.0
  %903 = vmatpush1.msra.mxu0 %v873
  %904 = vmatprep.subr.mxu0 0.0
  %905 = vmatpush1.msra.mxu0 %v872
  %906 = vmatprep.subr.mxu0 0.0
  %907 = vmatpush1.msra.mxu0 %v871
  %908 = vmatprep.subr.mxu0 0.0
  %909 = vmatpush1.msra.mxu0 %v870
  %910 = vmatprep.subr.mxu0 0.0
  %911 = vmatpush2.msra.mxu0 0.0
  %912 = vmatprep.subr.mxu0 0.0
  %913 = vmatpush2.msra.mxu0 0.0
  %914 = vmatprep.subr.mxu0 0.0
  %915 = vmatpush2.msra.mxu0 0.0
  %916 = vmatprep.subr.mxu0 0.0
  %917 = vmatpush2.msra.mxu0 0.0
  %918 = vmatprep.subr.mxu0 0.0
  %919 = vmatpush2.msra.mxu0 0.0
  %920 = vmatprep.subr.mxu0 0.0
  %921 = vmatpush2.msra.mxu0 0.0
  %922 = vmatprep.subr.mxu0 0.0
  %923 = vmatpush2.msra.mxu0 0.0
  %924 = vmatprep.subr.mxu0 0.0
  %925 = vmatpush2.msra.mxu0 0.0
  %926 = vmatprep.subr.mxu0 0.0
  %927 = vmatpush2.msra.mxu0 0.0
  %928 = vmatprep.subr.mxu0 0.0
  %929 = vmatpush2.msra.mxu0 0.0
  %930 = vmatprep.subr.mxu0 0.0
  %931 = vmatpush2.msra.mxu0 0.0
  %932 = vmatprep.subr.mxu0 0.0
  %933 = vmatpush2.msra.mxu0 0.0
  %934 = vmatprep.subr.mxu0 0.0
  %935 = vmatpush2.msra.mxu0 0.0
  %936 = vmatprep.subr.mxu0 0.0
  %937 = vmatpush2.msra.mxu0 0.0
  %938 = vmatprep.subr.mxu0 0.0
  %939 = vmatpush2.msra.mxu0 0.0
  %940 = vmatprep.subr.mxu0 0.0
  %941 = vmatpush2.msra.mxu0 0.0
  %942 = vmatprep.mubr.f32.mxu0 0.0
  %943 = vmatmul.mubr.f32.gmra.mxu0 %v874
  %v944 = vpop.f32.mrf.mxu0
  %v945 = vadd.f32 0.0, %v944
  %v946 = vpop.f32.mrf.mxu0
  %947 = vmatprep.mubr.f32.mxu0 0.0
  %948 = vmatmul.mubr.f32.gmra.mxu0 %v876
  %v949 = vpop.f32.mrf.mxu0
  %v950 = vadd.f32 0.0, %v949
  %v951 = vpop.f32.mrf.mxu0
  %952 = vdwg.mxu0
  %v953 = vadd.f32 %v868, %v945
  %v954 = vadd.f32 %v869, %v950
  %v955 = vtanh.pop %v953
  %v956 = vtanh.pop %v954
  %v957 = vmul.f32 %v955, %v33
  %v958 = vmul.f32 %v956, %v33
  %v959 = vadd.f32 %v957, %v34
  %v960 = vadd.f32 %v958, %v34
  %v961 = vmul.f32 %v959, %v842
  %v962 = vmul.f32 %v960, %v843
  %965 = vrot.lane.b32.xlu0 %v959, 64
  %v966 = vpop.permute.xlu0 %965
  %967 = vrot.lane.b32.xlu0 %v960, 64
  %v968 = vpop.permute.xlu0 %967
  %v971 = vmul.f32 %v959, %v966
  %v972 = vmul.f32 %v960, %v968
  %975 = vrot.lane.b32.xlu0 %v971, 32
  %v976 = vpop.permute.xlu0 %975
  %977 = vrot.lane.b32.xlu0 %v972, 32
  %v978 = vpop.permute.xlu0 %977
  %v981 = vadd.f32 %v961, %v976
  %v982 = vadd.f32 %v962, %v978
  %v983 = vtanh.pop %v981
  %v984 = vtanh.pop %v982
  %987 = vrot.lane.b32.xlu0 %v983, 64
  %v988 = vpop.permute.xlu0 %987
  %989 = vrot.lane.b32.xlu0 %v984, 64
  %v990 = vpop.permute.xlu0 %989
  %v993 = vmul.f32 %v959, %v988
  %v994 = vmul.f32 %v960, %v990
  %997 = vrot.lane.b32.xlu0 %v993, 32
  %v998 = vpop.permute.xlu0 %997
  %999 = vrot.lane.b32.xlu0 %v994, 32
  %v1000 = vpop.permute.xlu0 %999
  %s1003 = scalar_lea.vmem [#allocation3], 96
  %1004 = vst.msk [vmem:[%s1003] sm:$0xff] %vm41, %v998
  %1005 = vst.msk [vmem:[%s1003 + $0x8] sm:$0xff] %vm41, %v1000
  %s1006 = scalar_lea.vmem %s0, 112
  %v1007 = vld [vmem:[%s1006] sm:$0xff]
  %v1008 = vld [vmem:[%s1006 + $0x8] sm:$0xff]
  %v1009 = vld [vmem:[%s1] sm:$0xff]
  %v1010 = vld [vmem:[%s1 + $0x8] sm:$0xff]
  %v1011 = vld [vmem:[%s1 + $0x10] sm:$0xff]
  %v1012 = vld [vmem:[%s1 + $0x18] sm:$0xff]
  %v1013 = vsel %vm41, %v998, 0
  %v1015 = vsel %vm41, %v1000, 0
  %1017 = vmatprep.subr.mxu0 0.0
  %1018 = vmatpush1.msra.mxu0 0.0
  %1019 = vmatprep.subr.mxu0 0.0
  %1020 = vmatpush1.msra.mxu0 0.0
  %1021 = vmatprep.subr.mxu0 0.0
  %1022 = vmatpush1.msra.mxu0 0.0
  %1023 = vmatprep.subr.mxu0 0.0
  %1024 = vmatpush1.msra.mxu0 0.0
  %1025 = vmatprep.subr.mxu0 0.0
  %1026 = vmatpush1.msra.mxu0 0.0
  %1027 = vmatprep.subr.mxu0 0.0
  %1028 = vmatpush1.msra.mxu0 0.0
  %1029 = vmatprep.subr.mxu0 0.0
  %1030 = vmatpush1.msra.mxu0 0.0
  %1031 = vmatprep.subr.mxu0 0.0
  %1032 = vmatpush1.msra.mxu0 0.0
  %1033 = vmatprep.subr.mxu0 0.0
  %1034 = vmatpush1.msra.mxu0 0.0
  %1035 = vmatprep.subr.mxu0 0.0
  %1036 = vmatpush1.msra.mxu0 0.0
  %1037 = vmatprep.subr.mxu0 0.0
  %1038 = vmatpush1.msra.mxu0 0.0
  %1039 = vmatprep.subr.mxu0 0.0
  %1040 = vmatpush1.msra.mxu0 0.0
  %1041 = vmatprep.subr.mxu0 0.0
  %1042 = vmatpush1.msra.mxu0 %v1012
  %1043 = vmatprep.subr.mxu0 0.0
  %1044 = vmatpush1.msra.mxu0 %v1011
  %1045 = vmatprep.subr.mxu0 0.0
  %1046 = vmatpush1.msra.mxu0 %v1010
  %1047 = vmatprep.subr.mxu0 0.0
  %1048 = vmatpush1.msra.mxu0 %v1009
  %1049 = vmatprep.subr.mxu0 0.0
  %1050 = vmatpush2.msra.mxu0 0.0
  %1051 = vmatprep.subr.mxu0 0.0
  %1052 = vmatpush2.msra.mxu0 0.0
  %1053 = vmatprep.subr.mxu0 0.0
  %1054 = vmatpush2.msra.mxu0 0.0
  %1055 = vmatprep.subr.mxu0 0.0
  %1056 = vmatpush2.msra.mxu0 0.0
  %1057 = vmatprep.subr.mxu0 0.0
  %1058 = vmatpush2.msra.mxu0 0.0
  %1059 = vmatprep.subr.mxu0 0.0
  %1060 = vmatpush2.msra.mxu0 0.0
  %1061 = vmatprep.subr.mxu0 0.0
  %1062 = vmatpush2.msra.mxu0 0.0
  %1063 = vmatprep.subr.mxu0 0.0
  %1064 = vmatpush2.msra.mxu0 0.0
  %1065 = vmatprep.subr.mxu0 0.0
  %1066 = vmatpush2.msra.mxu0 0.0
  %1067 = vmatprep.subr.mxu0 0.0
  %1068 = vmatpush2.msra.mxu0 0.0
  %1069 = vmatprep.subr.mxu0 0.0
  %1070 = vmatpush2.msra.mxu0 0.0
  %1071 = vmatprep.subr.mxu0 0.0
  %1072 = vmatpush2.msra.mxu0 0.0
  %1073 = vmatprep.subr.mxu0 0.0
  %1074 = vmatpush2.msra.mxu0 0.0
  %1075 = vmatprep.subr.mxu0 0.0
  %1076 = vmatpush2.msra.mxu0 0.0
  %1077 = vmatprep.subr.mxu0 0.0
  %1078 = vmatpush2.msra.mxu0 0.0
  %1079 = vmatprep.subr.mxu0 0.0
  %1080 = vmatpush2.msra.mxu0 0.0
  %1081 = vmatprep.mubr.f32.mxu0 0.0
  %1082 = vmatmul.mubr.f32.gmra.mxu0 %v1013
  %v1083 = vpop.f32.mrf.mxu0
  %v1084 = vadd.f32 0.0, %v1083
  %v1085 = vpop.f32.mrf.mxu0
  %1086 = vmatprep.mubr.f32.mxu0 0.0
  %1087 = vmatmul.mubr.f32.gmra.mxu0 %v1015
  %v1088 = vpop.f32.mrf.mxu0
  %v1089 = vadd.f32 0.0, %v1088
  %v1090 = vpop.f32.mrf.mxu0
  %1091 = vdwg.mxu0
  %v1092 = vadd.f32 %v1007, %v1084
  %v1093 = vadd.f32 %v1008, %v1089
  %v1094 = vtanh.pop %v1092
  %v1095 = vtanh.pop %v1093
  %v1096 = vmul.f32 %v1094, %v33
  %v1097 = vmul.f32 %v1095, %v33
  %v1098 = vadd.f32 %v1096, %v34
  %v1099 = vadd.f32 %v1097, %v34
  %v1100 = vmul.f32 %v1098, %v981
  %v1101 = vmul.f32 %v1099, %v982
  %1104 = vrot.lane.b32.xlu0 %v1098, 64
  %v1105 = vpop.permute.xlu0 %1104
  %1106 = vrot.lane.b32.xlu0 %v1099, 64
  %v1107 = vpop.permute.xlu0 %1106
  %v1110 = vmul.f32 %v1098, %v1105
  %v1111 = vmul.f32 %v1099, %v1107
  %1114 = vrot.lane.b32.xlu0 %v1110, 32
  %v1115 = vpop.permute.xlu0 %1114
  %1116 = vrot.lane.b32.xlu0 %v1111, 32
  %v1117 = vpop.permute.xlu0 %1116
  %v1120 = vadd.f32 %v1100, %v1115
  %v1121 = vadd.f32 %v1101, %v1117
  %v1122 = vtanh.pop %v1120
  %v1123 = vtanh.pop %v1121
  %1126 = vrot.lane.b32.xlu0 %v1122, 64
  %v1127 = vpop.permute.xlu0 %1126
  %1128 = vrot.lane.b32.xlu0 %v1123, 64
  %v1129 = vpop.permute.xlu0 %1128
  %v1132 = vmul.f32 %v1098, %v1127
  %v1133 = vmul.f32 %v1099, %v1129
  %1136 = vrot.lane.b32.xlu0 %v1132, 32
  %v1137 = vpop.permute.xlu0 %1136
  %1138 = vrot.lane.b32.xlu0 %v1133, 32
  %v1139 = vpop.permute.xlu0 %1138
  %s1142 = scalar_lea.vmem [#allocation3], 112
  %1143 = vst.msk [vmem:[%s1142] sm:$0xff] %vm41, %v1137
  %1144 = vst.msk [vmem:[%s1142 + $0x8] sm:$0xff] %vm41, %v1139
  %v1145 = vld [vmem:[#allocation3] sm:$0xff]
  %v1146 = vld [vmem:[#allocation3 + $0x8] sm:$0xff]
  %v1147 = vld [vmem:[#allocation3 + $0x10] sm:$0xff]
  %v1148 = vld [vmem:[#allocation3 + $0x18] sm:$0xff]
  %v1149 = vld [vmem:[#allocation3 + $0x20] sm:$0xff]
  %v1150 = vld [vmem:[#allocation3 + $0x28] sm:$0xff]
  %v1151 = vld [vmem:[#allocation3 + $0x30] sm:$0xff]
  %v1152 = vld [vmem:[#allocation3 + $0x38] sm:$0xff]
  %v1153 = vld [vmem:[#allocation3 + $0x40] sm:$0xff]
  %v1154 = vld [vmem:[#allocation3 + $0x48] sm:$0xff]
  %v1155 = vld [vmem:[#allocation3 + $0x50] sm:$0xff]
  %v1156 = vld [vmem:[#allocation3 + $0x58] sm:$0xff]
  %v1157 = vld [vmem:[#allocation3 + $0x60] sm:$0xff]
  %v1158 = vld [vmem:[#allocation3 + $0x68] sm:$0xff]
  %v1159 = vld [vmem:[#allocation3 + $0x70] sm:$0xff]
  %v1160 = vld [vmem:[#allocation3 + $0x78] sm:$0xff]
  %v1161 = vld [vmem:[%s2] sm:$0xff]
  %v1162 = vld [vmem:[%s2 + $0x8] sm:$0xff]
  %v1163 = vld [vmem:[%s2 + $0x10] sm:$0xff]
  %v1164 = vld [vmem:[%s2 + $0x18] sm:$0xff]
  %v1165 = vld [vmem:[%s4] sm:$0x1]
  %v1167 = vlaneseq
  %v1168 = vshrl.u32 %v1167, 7
  %v1169 = vsub.s32 0, %v1168
  %v1170 = vrot.slane %v1165, %v1169
  %v1173 = vsel %vm41, %v1145, 0
  %v1176 = vsel %vm41, %v1146, 0
  %v1179 = vsel %vm41, %v1147, 0
  %v1182 = vsel %vm41, %v1148, 0
  %v1185 = vsel %vm41, %v1149, 0
  %v1188 = vsel %vm41, %v1150, 0
  %v1191 = vsel %vm41, %v1151, 0
  %v1194 = vsel %vm41, %v1152, 0
  %v1197 = vsel %vm41, %v1153, 0
  %v1200 = vsel %vm41, %v1154, 0
  %v1203 = vsel %vm41, %v1155, 0
  %v1206 = vsel %vm41, %v1156, 0
  %v1209 = vsel %vm41, %v1157, 0
  %v1212 = vsel %vm41, %v1158, 0
  %v1215 = vsel %vm41, %v1159, 0
  %v1218 = vsel %vm41, %v1160, 0
  %1220 = vmatprep.subr.mxu0 0.0
  %1221 = vmatpush1.msra.mxu0 0.0
  %1222 = vmatprep.subr.mxu0 0.0
  %1223 = vmatpush1.msra.mxu0 0.0
  %1224 = vmatprep.subr.mxu0 0.0
  %1225 = vmatpush1.msra.mxu0 0.0
  %1226 = vmatprep.subr.mxu0 0.0
  %1227 = vmatpush1.msra.mxu0 0.0
  %1228 = vmatprep.subr.mxu0 0.0
  %1229 = vmatpush1.msra.mxu0 0.0
  %1230 = vmatprep.subr.mxu0 0.0
  %1231 = vmatpush1.msra.mxu0 0.0
  %1232 = vmatprep.subr.mxu0 0.0
  %1233 = vmatpush1.msra.mxu0 0.0
  %1234 = vmatprep.subr.mxu0 0.0
  %1235 = vmatpush1.msra.mxu0 0.0
  %1236 = vmatprep.subr.mxu0 0.0
  %1237 = vmatpush1.msra.mxu0 0.0
  %1238 = vmatprep.subr.mxu0 0.0
  %1239 = vmatpush1.msra.mxu0 0.0
  %1240 = vmatprep.subr.mxu0 0.0
  %1241 = vmatpush1.msra.mxu0 0.0
  %1242 = vmatprep.subr.mxu0 0.0
  %1243 = vmatpush1.msra.mxu0 0.0
  %1244 = vmatprep.subr.mxu0 0.0
  %1245 = vmatpush1.msra.mxu0 %v1164
  %1246 = vmatprep.subr.mxu0 0.0
  %1247 = vmatpush1.msra.mxu0 %v1163
  %1248 = vmatprep.subr.mxu0 0.0
  %1249 = vmatpush1.msra.mxu0 %v1162
  %1250 = vmatprep.subr.mxu0 0.0
  %1251 = vmatpush1.msra.mxu0 %v1161
  %1252 = vmatprep.subr.mxu0 0.0
  %1253 = vmatpush2.msra.mxu0 0.0
  %1254 = vmatprep.subr.mxu0 0.0
  %1255 = vmatpush2.msra.mxu0 0.0
  %1256 = vmatprep.subr.mxu0 0.0
  %1257 = vmatpush2.msra.mxu0 0.0
  %1258 = vmatprep.subr.mxu0 0.0
  %1259 = vmatpush2.msra.mxu0 0.0
  %1260 = vmatprep.subr.mxu0 0.0
  %1261 = vmatpush2.msra.mxu0 0.0
  %1262 = vmatprep.subr.mxu0 0.0
  %1263 = vmatpush2.msra.mxu0 0.0
  %1264 = vmatprep.subr.mxu0 0.0
  %1265 = vmatpush2.msra.mxu0 0.0
  %1266 = vmatprep.subr.mxu0 0.0
  %1267 = vmatpush2.msra.mxu0 0.0
  %1268 = vmatprep.subr.mxu0 0.0
  %1269 = vmatpush2.msra.mxu0 0.0
  %1270 = vmatprep.subr.mxu0 0.0
  %1271 = vmatpush2.msra.mxu0 0.0
  %1272 = vmatprep.subr.mxu0 0.0
  %1273 = vmatpush2.msra.mxu0 0.0
  %1274 = vmatprep.subr.mxu0 0.0
  %1275 = vmatpush2.msra.mxu0 0.0
  %1276 = vmatprep.subr.mxu0 0.0
  %1277 = vmatpush2.msra.mxu0 0.0
  %1278 = vmatprep.subr.mxu0 0.0
  %1279 = vmatpush2.msra.mxu0 0.0
  %1280 = vmatprep.subr.mxu0 0.0
  %1281 = vmatpush2.msra.mxu0 0.0
  %1282 = vmatprep.subr.mxu0 0.0
  %1283 = vmatpush2.msra.mxu0 0.0
  %1284 = vmatprep.mubr.f32.mxu0 0.0
  %1285 = vmatmul.mubr.f32.gmra.mxu0 %v1173
  %v1286 = vpop.f32.mrf.mxu0
  %v1287 = vadd.f32 %v1170, %v1286
  %v1288 = vpop.f32.mrf.mxu0
  %1289 = vmatprep.mubr.f32.mxu0 0.0
  %1290 = vmatmul.mubr.f32.gmra.mxu0 %v1176
  %v1291 = vpop.f32.mrf.mxu0
  %v1292 = vadd.f32 %v1170, %v1291
  %v1293 = vpop.f32.mrf.mxu0
  %1294 = vmatprep.mubr.f32.mxu0 0.0
  %1295 = vmatmul.mubr.f32.gmra.mxu0 %v1179
  %v1296 = vpop.f32.mrf.mxu0
  %v1297 = vadd.f32 %v1170, %v1296
  %v1298 = vpop.f32.mrf.mxu0
  %1299 = vmatprep.mubr.f32.mxu0 0.0
  %1300 = vmatmul.mubr.f32.gmra.mxu0 %v1182
  %v1301 = vpop.f32.mrf.mxu0
  %v1302 = vadd.f32 %v1170, %v1301
  %v1303 = vpop.f32.mrf.mxu0
  %1304 = vmatprep.mubr.f32.mxu0 0.0
  %1305 = vmatmul.mubr.f32.gmra.mxu0 %v1185
  %v1306 = vpop.f32.mrf.mxu0
  %v1307 = vadd.f32 %v1170, %v1306
  %v1308 = vpop.f32.mrf.mxu0
  %1309 = vmatprep.mubr.f32.mxu0 0.0
  %1310 = vmatmul.mubr.f32.gmra.mxu0 %v1188
  %v1311 = vpop.f32.mrf.mxu0
  %v1312 = vadd.f32 %v1170, %v1311
  %v1313 = vpop.f32.mrf.mxu0
  %1314 = vmatprep.mubr.f32.mxu0 0.0
  %1315 = vmatmul.mubr.f32.gmra.mxu0 %v1191
  %v1316 = vpop.f32.mrf.mxu0
  %v1317 = vadd.f32 %v1170, %v1316
  %v1318 = vpop.f32.mrf.mxu0
  %1319 = vmatprep.mubr.f32.mxu0 0.0
  %1320 = vmatmul.mubr.f32.gmra.mxu0 %v1194
  %v1321 = vpop.f32.mrf.mxu0
  %v1322 = vadd.f32 %v1170, %v1321
  %v1323 = vpop.f32.mrf.mxu0
  %1324 = vmatprep.mubr.f32.mxu0 0.0
  %1325 = vmatmul.mubr.f32.gmra.mxu0 %v1197
  %v1326 = vpop.f32.mrf.mxu0
  %v1327 = vadd.f32 %v1170, %v1326
  %v1328 = vpop.f32.mrf.mxu0
  %1329 = vmatprep.mubr.f32.mxu0 0.0
  %1330 = vmatmul.mubr.f32.gmra.mxu0 %v1200
  %v1331 = vpop.f32.mrf.mxu0
  %v1332 = vadd.f32 %v1170, %v1331
  %v1333 = vpop.f32.mrf.mxu0
  %1334 = vmatprep.mubr.f32.mxu0 0.0
  %1335 = vmatmul.mubr.f32.gmra.mxu0 %v1203
  %v1336 = vpop.f32.mrf.mxu0
  %v1337 = vadd.f32 %v1170, %v1336
  %v1338 = vpop.f32.mrf.mxu0
  %1339 = vmatprep.mubr.f32.mxu0 0.0
  %1340 = vmatmul.mubr.f32.gmra.mxu0 %v1206
  %v1341 = vpop.f32.mrf.mxu0
  %v1342 = vadd.f32 %v1170, %v1341
  %v1343 = vpop.f32.mrf.mxu0
  %1344 = vmatprep.mubr.f32.mxu0 0.0
  %1345 = vmatmul.mubr.f32.gmra.mxu0 %v1209
  %v1346 = vpop.f32.mrf.mxu0
  %v1347 = vadd.f32 %v1170, %v1346
  %v1348 = vpop.f32.mrf.mxu0
  %1349 = vmatprep.mubr.f32.mxu0 0.0
  %1350 = vmatmul.mubr.f32.gmra.mxu0 %v1212
  %v1351 = vpop.f32.mrf.mxu0
  %v1352 = vadd.f32 %v1170, %v1351
  %v1353 = vpop.f32.mrf.mxu0
  %1354 = vmatprep.mubr.f32.mxu0 0.0
  %1355 = vmatmul.mubr.f32.gmra.mxu0 %v1215
  %v1356 = vpop.f32.mrf.mxu0
  %v1357 = vadd.f32 %v1170, %v1356
  %v1358 = vpop.f32.mrf.mxu0
  %1359 = vmatprep.mubr.f32.mxu0 0.0
  %1360 = vmatmul.mubr.f32.gmra.mxu0 %v1218
  %v1361 = vpop.f32.mrf.mxu0
  %v1362 = vadd.f32 %v1170, %v1361
  %v1363 = vpop.f32.mrf.mxu0
  %1364 = vdwg.mxu0
  %1365 = vst [vmem:[#allocation2] sm:$0xff] %v1287
  %1366 = vst [vmem:[#allocation2 + $0x8] sm:$0xff] %v1292
  %1367 = vst [vmem:[#allocation2 + $0x10] sm:$0xff] %v1297
  %1368 = vst [vmem:[#allocation2 + $0x18] sm:$0xff] %v1302
  %1369 = vst [vmem:[#allocation2 + $0x20] sm:$0xff] %v1307
  %1370 = vst [vmem:[#allocation2 + $0x28] sm:$0xff] %v1312
  %1371 = vst [vmem:[#allocation2 + $0x30] sm:$0xff] %v1317
  %1372 = vst [vmem:[#allocation2 + $0x38] sm:$0xff] %v1322
  %1373 = vst [vmem:[#allocation2 + $0x40] sm:$0xff] %v1327
  %1374 = vst [vmem:[#allocation2 + $0x48] sm:$0xff] %v1332
  %1375 = vst [vmem:[#allocation2 + $0x50] sm:$0xff] %v1337
  %1376 = vst [vmem:[#allocation2 + $0x58] sm:$0xff] %v1342
  %1377 = vst [vmem:[#allocation2 + $0x60] sm:$0xff] %v1347
  %1378 = vst [vmem:[#allocation2 + $0x68] sm:$0xff] %v1352
  %1379 = vst [vmem:[#allocation2 + $0x70] sm:$0xff] %v1357
  %1380 = vst [vmem:[#allocation2 + $0x78] sm:$0xff] %v1362
  %v1381 = vld [vmem:[#allocation2] sm:$0xff]
  %v1382 = vld [vmem:[#allocation2 + $0x8] sm:$0xff]
  %v1383 = vld [vmem:[%s3] sm:$0xff]
  %v1384 = vld [vmem:[%s3 + $0x8] sm:$0xff]
  %v1385 = vld [vmem:[%s3 + $0x10] sm:$0xff]
  %v1386 = vld [vmem:[%s3 + $0x18] sm:$0xff]
  %1387 = vmatprep.subr.mxu0 0.0
  %1388 = vmatpush1.msra.mxu0 0.0
  %1389 = vmatprep.subr.mxu0 0.0
  %1390 = vmatpush1.msra.mxu0 0.0
  %1391 = vmatprep.subr.mxu0 0.0
  %1392 = vmatpush1.msra.mxu0 0.0
  %1393 = vmatprep.subr.mxu0 0.0
  %1394 = vmatpush1.msra.mxu0 0.0
  %1395 = vmatprep.subr.mxu0 0.0
  %1396 = vmatpush1.msra.mxu0 0.0
  %1397 = vmatprep.subr.mxu0 0.0
  %1398 = vmatpush1.msra.mxu0 0.0
  %1399 = vmatprep.subr.mxu0 0.0
  %1400 = vmatpush1.msra.mxu0 0.0
  %1401 = vmatprep.subr.mxu0 0.0
  %1402 = vmatpush1.msra.mxu0 0.0
  %1403 = vmatprep.subr.mxu0 0.0
  %1404 = vmatpush1.msra.mxu0 0.0
  %1405 = vmatprep.subr.mxu0 0.0
  %1406 = vmatpush1.msra.mxu0 0.0
  %1407 = vmatprep.subr.mxu0 0.0
  %1408 = vmatpush1.msra.mxu0 0.0
  %1409 = vmatprep.subr.mxu0 0.0
  %1410 = vmatpush1.msra.mxu0 0.0
  %1411 = vmatprep.subr.mxu0 0.0
  %1412 = vmatpush1.msra.mxu0 %v1386
  %1413 = vmatprep.subr.mxu0 0.0
  %1414 = vmatpush1.msra.mxu0 %v1385
  %1415 = vmatprep.subr.mxu0 0.0
  %1416 = vmatpush1.msra.mxu0 %v1384
  %1417 = vmatprep.subr.mxu0 0.0
  %1418 = vmatpush1.msra.mxu0 %v1383
  %1419 = vmatprep.subr.mxu0 0.0
  %1420 = vmatpush2.msra.mxu0 0.0
  %1421 = vmatprep.subr.mxu0 0.0
  %1422 = vmatpush2.msra.mxu0 0.0
  %1423 = vmatprep.subr.mxu0 0.0
  %1424 = vmatpush2.msra.mxu0 0.0
  %1425 = vmatprep.subr.mxu0 0.0
  %1426 = vmatpush2.msra.mxu0 0.0
  %1427 = vmatprep.subr.mxu0 0.0
  %1428 = vmatpush2.msra.mxu0 0.0
  %1429 = vmatprep.subr.mxu0 0.0
  %1430 = vmatpush2.msra.mxu0 0.0
  %1431 = vmatprep.subr.mxu0 0.0
  %1432 = vmatpush2.msra.mxu0 0.0
  %1433 = vmatprep.subr.mxu0 0.0
  %1434 = vmatpush2.msra.mxu0 0.0
  %1435 = vmatprep.subr.mxu0 0.0
  %1436 = vmatpush2.msra.mxu0 0.0
  %1437 = vmatprep.subr.mxu0 0.0
  %1438 = vmatpush2.msra.mxu0 0.0
  %1439 = vmatprep.subr.mxu0 0.0
  %1440 = vmatpush2.msra.mxu0 0.0
  %1441 = vmatprep.subr.mxu0 0.0
  %1442 = vmatpush2.msra.mxu0 0.0
  %1443 = vmatprep.subr.mxu0 0.0
  %1444 = vmatpush2.msra.mxu0 0.0
  %1445 = vmatprep.subr.mxu0 0.0
  %1446 = vmatpush2.msra.mxu0 0.0
  %1447 = vmatprep.subr.mxu0 0.0
  %1448 = vmatpush2.msra.mxu0 0.0
  %1449 = vmatprep.subr.mxu0 0.0
  %1450 = vmatpush2.msra.mxu0 0.0
  %1451 = vmatprep.mubr.f32.mxu0 0.0
  %1452 = vmatmul.mubr.f32.gmra.mxu0 %v43
  %v1453 = vpop.f32.mrf.mxu0
  %v1454 = vadd.f32 0.0, %v1453
  %v1455 = vpop.f32.mrf.mxu0
  %1456 = vmatprep.mubr.f32.mxu0 0.0
  %1457 = vmatmul.mubr.f32.gmra.mxu0 %v43
  %v1458 = vpop.f32.mrf.mxu0
  %v1459 = vadd.f32 0.0, %v1458
  %v1460 = vpop.f32.mrf.mxu0
  %1461 = vdwg.mxu0
  %v1462 = vadd.f32 %v1381, %v1454
  %v1463 = vadd.f32 %v1382, %v1459
  %v1464 = vtanh.pop %v1462
  %v1465 = vtanh.pop %v1463
  %v1466 = vmul.f32 %v1464, %v33
  %v1467 = vmul.f32 %v1465, %v33
  %v1468 = vadd.f32 %v1466, %v34
  %v1469 = vadd.f32 %v1467, %v34
  %v1470 = vmul.f32 %v1468, 0.0
  %v1471 = vmul.f32 %v1469, 0.0
  %1474 = vrot.lane.b32.xlu0 %v1468, 64
  %v1475 = vpop.permute.xlu0 %1474
  %1476 = vrot.lane.b32.xlu0 %v1469, 64
  %v1477 = vpop.permute.xlu0 %1476
  %v1480 = vmul.f32 %v1468, %v1475
  %v1481 = vmul.f32 %v1469, %v1477
  %1484 = vrot.lane.b32.xlu0 %v1480, 32
  %v1485 = vpop.permute.xlu0 %1484
  %1486 = vrot.lane.b32.xlu0 %v1481, 32
  %v1487 = vpop.permute.xlu0 %1486
  %v1490 = vadd.f32 %v1470, %v1485
  %v1491 = vadd.f32 %v1471, %v1487
  %v1492 = vtanh.pop %v1490
  %v1493 = vtanh.pop %v1491
  %1496 = vrot.lane.b32.xlu0 %v1492, 64
  %v1497 = vpop.permute.xlu0 %1496
  %1498 = vrot.lane.b32.xlu0 %v1493, 64
  %v1499 = vpop.permute.xlu0 %1498
  %v1502 = vmul.f32 %v1468, %v1497
  %v1503 = vmul.f32 %v1469, %v1499
  %s1504 = scalar_lea.vmem [#allocation2], 16
  %v1505 = vld [vmem:[%s1504] sm:$0xff]
  %v1506 = vld [vmem:[%s1504 + $0x8] sm:$0xff]
  %1509 = vrot.lane.b32.xlu0 %v1502, 32
  %v1510 = vpop.permute.xlu0 %1509
  %1511 = vrot.lane.b32.xlu0 %v1503, 32
  %v1512 = vpop.permute.xlu0 %1511
  %v1513 = vsel %vm41, %v1510, 0
  %v1515 = vsel %vm41, %v1512, 0
  %1517 = vmatprep.subr.mxu0 0.0
  %1518 = vmatpush1.msra.mxu0 0.0
  %1519 = vmatprep.subr.mxu0 0.0
  %1520 = vmatpush1.msra.mxu0 0.0
  %1521 = vmatprep.subr.mxu0 0.0
  %1522 = vmatpush1.msra.mxu0 0.0
  %1523 = vmatprep.subr.mxu0 0.0
  %1524 = vmatpush1.msra.mxu0 0.0
  %1525 = vmatprep.subr.mxu0 0.0
  %1526 = vmatpush1.msra.mxu0 0.0
  %1527 = vmatprep.subr.mxu0 0.0
  %1528 = vmatpush1.msra.mxu0 0.0
  %1529 = vmatprep.subr.mxu0 0.0
  %1530 = vmatpush1.msra.mxu0 0.0
  %1531 = vmatprep.subr.mxu0 0.0
  %1532 = vmatpush1.msra.mxu0 0.0
  %1533 = vmatprep.subr.mxu0 0.0
  %1534 = vmatpush1.msra.mxu0 0.0
  %1535 = vmatprep.subr.mxu0 0.0
  %1536 = vmatpush1.msra.mxu0 0.0
  %1537 = vmatprep.subr.mxu0 0.0
  %1538 = vmatpush1.msra.mxu0 0.0
  %1539 = vmatprep.subr.mxu0 0.0
  %1540 = vmatpush1.msra.mxu0 0.0
  %1541 = vmatprep.subr.mxu0 0.0
  %1542 = vmatpush1.msra.mxu0 %v1386
  %1543 = vmatprep.subr.mxu0 0.0
  %1544 = vmatpush1.msra.mxu0 %v1385
  %1545 = vmatprep.subr.mxu0 0.0
  %1546 = vmatpush1.msra.mxu0 %v1384
  %1547 = vmatprep.subr.mxu0 0.0
  %1548 = vmatpush1.msra.mxu0 %v1383
  %1549 = vmatprep.subr.mxu0 0.0
  %1550 = vmatpush2.msra.mxu0 0.0
  %1551 = vmatprep.subr.mxu0 0.0
  %1552 = vmatpush2.msra.mxu0 0.0
  %1553 = vmatprep.subr.mxu0 0.0
  %1554 = vmatpush2.msra.mxu0 0.0
  %1555 = vmatprep.subr.mxu0 0.0
  %1556 = vmatpush2.msra.mxu0 0.0
  %1557 = vmatprep.subr.mxu0 0.0
  %1558 = vmatpush2.msra.mxu0 0.0
  %1559 = vmatprep.subr.mxu0 0.0
  %1560 = vmatpush2.msra.mxu0 0.0
  %1561 = vmatprep.subr.mxu0 0.0
  %1562 = vmatpush2.msra.mxu0 0.0
  %1563 = vmatprep.subr.mxu0 0.0
  %1564 = vmatpush2.msra.mxu0 0.0
  %1565 = vmatprep.subr.mxu0 0.0
  %1566 = vmatpush2.msra.mxu0 0.0
  %1567 = vmatprep.subr.mxu0 0.0
  %1568 = vmatpush2.msra.mxu0 0.0
  %1569 = vmatprep.subr.mxu0 0.0
  %1570 = vmatpush2.msra.mxu0 0.0
  %1571 = vmatprep.subr.mxu0 0.0
  %1572 = vmatpush2.msra.mxu0 0.0
  %1573 = vmatprep.subr.mxu0 0.0
  %1574 = vmatpush2.msra.mxu0 0.0
  %1575 = vmatprep.subr.mxu0 0.0
  %1576 = vmatpush2.msra.mxu0 0.0
  %1577 = vmatprep.subr.mxu0 0.0
  %1578 = vmatpush2.msra.mxu0 0.0
  %1579 = vmatprep.subr.mxu0 0.0
  %1580 = vmatpush2.msra.mxu0 0.0
  %1581 = vmatprep.mubr.f32.mxu0 0.0
  %1582 = vmatmul.mubr.f32.gmra.mxu0 %v1513
  %v1583 = vpop.f32.mrf.mxu0
  %v1584 = vadd.f32 0.0, %v1583
  %v1585 = vpop.f32.mrf.mxu0
  %1586 = vmatprep.mubr.f32.mxu0 0.0
  %1587 = vmatmul.mubr.f32.gmra.mxu0 %v1515
  %v1588 = vpop.f32.mrf.mxu0
  %v1589 = vadd.f32 0.0, %v1588
  %v1590 = vpop.f32.mrf.mxu0
  %1591 = vdwg.mxu0
  %v1592 = vadd.f32 %v1505, %v1584
  %v1593 = vadd.f32 %v1506, %v1589
  %v1594 = vtanh.pop %v1592
  %v1595 = vtanh.pop %v1593
  %v1596 = vmul.f32 %v1594, %v33
  %v1597 = vmul.f32 %v1595, %v33
  %v1598 = vadd.f32 %v1596, %v34
  %v1599 = vadd.f32 %v1597, %v34
  %v1600 = vmul.f32 %v1598, %v1490
  %v1601 = vmul.f32 %v1599, %v1491
  %1604 = vrot.lane.b32.xlu0 %v1598, 64
  %v1605 = vpop.permute.xlu0 %1604
  %1606 = vrot.lane.b32.xlu0 %v1599, 64
  %v1607 = vpop.permute.xlu0 %1606
  %v1610 = vmul.f32 %v1598, %v1605
  %v1611 = vmul.f32 %v1599, %v1607
  %1614 = vrot.lane.b32.xlu0 %v1610, 32
  %v1615 = vpop.permute.xlu0 %1614
  %1616 = vrot.lane.b32.xlu0 %v1611, 32
  %v1617 = vpop.permute.xlu0 %1616
  %v1620 = vadd.f32 %v1600, %v1615
  %v1621 = vadd.f32 %v1601, %v1617
  %v1622 = vtanh.pop %v1620
  %v1623 = vtanh.pop %v1621
  %1626 = vrot.lane.b32.xlu0 %v1622, 64
  %v1627 = vpop.permute.xlu0 %1626
  %1628 = vrot.lane.b32.xlu0 %v1623, 64
  %v1629 = vpop.permute.xlu0 %1628
  %v1632 = vmul.f32 %v1598, %v1627
  %v1633 = vmul.f32 %v1599, %v1629
  %s1634 = scalar_lea.vmem [#allocation2], 32
  %v1635 = vld [vmem:[%s1634] sm:$0xff]
  %v1636 = vld [vmem:[%s1634 + $0x8] sm:$0xff]
  %1639 = vrot.lane.b32.xlu0 %v1632, 32
  %v1640 = vpop.permute.xlu0 %1639
  %1641 = vrot.lane.b32.xlu0 %v1633, 32
  %v1642 = vpop.permute.xlu0 %1641
  %v1643 = vsel %vm41, %v1640, 0
  %v1645 = vsel %vm41, %v1642, 0
  %1647 = vmatprep.subr.mxu0 0.0
  %1648 = vmatpush1.msra.mxu0 0.0
  %1649 = vmatprep.subr.mxu0 0.0
  %1650 = vmatpush1.msra.mxu0 0.0
  %1651 = vmatprep.subr.mxu0 0.0
  %1652 = vmatpush1.msra.mxu0 0.0
  %1653 = vmatprep.subr.mxu0 0.0
  %1654 = vmatpush1.msra.mxu0 0.0
  %1655 = vmatprep.subr.mxu0 0.0
  %1656 = vmatpush1.msra.mxu0 0.0
  %1657 = vmatprep.subr.mxu0 0.0
  %1658 = vmatpush1.msra.mxu0 0.0
  %1659 = vmatprep.subr.mxu0 0.0
  %1660 = vmatpush1.msra.mxu0 0.0
  %1661 = vmatprep.subr.mxu0 0.0
  %1662 = vmatpush1.msra.mxu0 0.0
  %1663 = vmatprep.subr.mxu0 0.0
  %1664 = vmatpush1.msra.mxu0 0.0
  %1665 = vmatprep.subr.mxu0 0.0
  %1666 = vmatpush1.msra.mxu0 0.0
  %1667 = vmatprep.subr.mxu0 0.0
  %1668 = vmatpush1.msra.mxu0 0.0
  %1669 = vmatprep.subr.mxu0 0.0
  %1670 = vmatpush1.msra.mxu0 0.0
  %1671 = vmatprep.subr.mxu0 0.0
  %1672 = vmatpush1.msra.mxu0 %v1386
  %1673 = vmatprep.subr.mxu0 0.0
  %1674 = vmatpush1.msra.mxu0 %v1385
  %1675 = vmatprep.subr.mxu0 0.0
  %1676 = vmatpush1.msra.mxu0 %v1384
  %1677 = vmatprep.subr.mxu0 0.0
  %1678 = vmatpush1.msra.mxu0 %v1383
  %1679 = vmatprep.subr.mxu0 0.0
  %1680 = vmatpush2.msra.mxu0 0.0
  %1681 = vmatprep.subr.mxu0 0.0
  %1682 = vmatpush2.msra.mxu0 0.0
  %1683 = vmatprep.subr.mxu0 0.0
  %1684 = vmatpush2.msra.mxu0 0.0
  %1685 = vmatprep.subr.mxu0 0.0
  %1686 = vmatpush2.msra.mxu0 0.0
  %1687 = vmatprep.subr.mxu0 0.0
  %1688 = vmatpush2.msra.mxu0 0.0
  %1689 = vmatprep.subr.mxu0 0.0
  %1690 = vmatpush2.msra.mxu0 0.0
  %1691 = vmatprep.subr.mxu0 0.0
  %1692 = vmatpush2.msra.mxu0 0.0
  %1693 = vmatprep.subr.mxu0 0.0
  %1694 = vmatpush2.msra.mxu0 0.0
  %1695 = vmatprep.subr.mxu0 0.0
  %1696 = vmatpush2.msra.mxu0 0.0
  %1697 = vmatprep.subr.mxu0 0.0
  %1698 = vmatpush2.msra.mxu0 0.0
  %1699 = vmatprep.subr.mxu0 0.0
  %1700 = vmatpush2.msra.mxu0 0.0
  %1701 = vmatprep.subr.mxu0 0.0
  %1702 = vmatpush2.msra.mxu0 0.0
  %1703 = vmatprep.subr.mxu0 0.0
  %1704 = vmatpush2.msra.mxu0 0.0
  %1705 = vmatprep.subr.mxu0 0.0
  %1706 = vmatpush2.msra.mxu0 0.0
  %1707 = vmatprep.subr.mxu0 0.0
  %1708 = vmatpush2.msra.mxu0 0.0
  %1709 = vmatprep.subr.mxu0 0.0
  %1710 = vmatpush2.msra.mxu0 0.0
  %1711 = vmatprep.mubr.f32.mxu0 0.0
  %1712 = vmatmul.mubr.f32.gmra.mxu0 %v1643
  %v1713 = vpop.f32.mrf.mxu0
  %v1714 = vadd.f32 0.0, %v1713
  %v1715 = vpop.f32.mrf.mxu0
  %1716 = vmatprep.mubr.f32.mxu0 0.0
  %1717 = vmatmul.mubr.f32.gmra.mxu0 %v1645
  %v1718 = vpop.f32.mrf.mxu0
  %v1719 = vadd.f32 0.0, %v1718
  %v1720 = vpop.f32.mrf.mxu0
  %1721 = vdwg.mxu0
  %v1722 = vadd.f32 %v1635, %v1714
  %v1723 = vadd.f32 %v1636, %v1719
  %v1724 = vtanh.pop %v1722
  %v1725 = vtanh.pop %v1723
  %v1726 = vmul.f32 %v1724, %v33
  %v1727 = vmul.f32 %v1725, %v33
  %v1728 = vadd.f32 %v1726, %v34
  %v1729 = vadd.f32 %v1727, %v34
  %v1730 = vmul.f32 %v1728, %v1620
  %v1731 = vmul.f32 %v1729, %v1621
  %1734 = vrot.lane.b32.xlu0 %v1728, 64
  %v1735 = vpop.permute.xlu0 %1734
  %1736 = vrot.lane.b32.xlu0 %v1729, 64
  %v1737 = vpop.permute.xlu0 %1736
  %v1740 = vmul.f32 %v1728, %v1735
  %v1741 = vmul.f32 %v1729, %v1737
  %1744 = vrot.lane.b32.xlu0 %v1740, 32
  %v1745 = vpop.permute.xlu0 %1744
  %1746 = vrot.lane.b32.xlu0 %v1741, 32
  %v1747 = vpop.permute.xlu0 %1746
  %v1750 = vadd.f32 %v1730, %v1745
  %v1751 = vadd.f32 %v1731, %v1747
  %v1752 = vtanh.pop %v1750
  %v1753 = vtanh.pop %v1751
  %1756 = vrot.lane.b32.xlu0 %v1752, 64
  %v1757 = vpop.permute.xlu0 %1756
  %1758 = vrot.lane.b32.xlu0 %v1753, 64
  %v1759 = vpop.permute.xlu0 %1758
  %v1762 = vmul.f32 %v1728, %v1757
  %v1763 = vmul.f32 %v1729, %v1759
  %s1764 = scalar_lea.vmem [#allocation2], 48
  %v1765 = vld [vmem:[%s1764] sm:$0xff]
  %v1766 = vld [vmem:[%s1764 + $0x8] sm:$0xff]
  %1769 = vrot.lane.b32.xlu0 %v1762, 32
  %v1770 = vpop.permute.xlu0 %1769
  %1771 = vrot.lane.b32.xlu0 %v1763, 32
  %v1772 = vpop.permute.xlu0 %1771
  %v1773 = vsel %vm41, %v1770, 0
  %v1775 = vsel %vm41, %v1772, 0
  %1777 = vmatprep.subr.mxu0 0.0
  %1778 = vmatpush1.msra.mxu0 0.0
  %1779 = vmatprep.subr.mxu0 0.0
  %1780 = vmatpush1.msra.mxu0 0.0
  %1781 = vmatprep.subr.mxu0 0.0
  %1782 = vmatpush1.msra.mxu0 0.0
  %1783 = vmatprep.subr.mxu0 0.0
  %1784 = vmatpush1.msra.mxu0 0.0
  %1785 = vmatprep.subr.mxu0 0.0
  %1786 = vmatpush1.msra.mxu0 0.0
  %1787 = vmatprep.subr.mxu0 0.0
  %1788 = vmatpush1.msra.mxu0 0.0
  %1789 = vmatprep.subr.mxu0 0.0
  %1790 = vmatpush1.msra.mxu0 0.0
  %1791 = vmatprep.subr.mxu0 0.0
  %1792 = vmatpush1.msra.mxu0 0.0
  %1793 = vmatprep.subr.mxu0 0.0
  %1794 = vmatpush1.msra.mxu0 0.0
  %1795 = vmatprep.subr.mxu0 0.0
  %1796 = vmatpush1.msra.mxu0 0.0
  %1797 = vmatprep.subr.mxu0 0.0
  %1798 = vmatpush1.msra.mxu0 0.0
  %1799 = vmatprep.subr.mxu0 0.0
  %1800 = vmatpush1.msra.mxu0 0.0
  %1801 = vmatprep.subr.mxu0 0.0
  %1802 = vmatpush1.msra.mxu0 %v1386
  %1803 = vmatprep.subr.mxu0 0.0
  %1804 = vmatpush1.msra.mxu0 %v1385
  %1805 = vmatprep.subr.mxu0 0.0
  %1806 = vmatpush1.msra.mxu0 %v1384
  %1807 = vmatprep.subr.mxu0 0.0
  %1808 = vmatpush1.msra.mxu0 %v1383
  %1809 = vmatprep.subr.mxu0 0.0
  %1810 = vmatpush2.msra.mxu0 0.0
  %1811 = vmatprep.subr.mxu0 0.0
  %1812 = vmatpush2.msra.mxu0 0.0
  %1813 = vmatprep.subr.mxu0 0.0
  %1814 = vmatpush2.msra.mxu0 0.0
  %1815 = vmatprep.subr.mxu0 0.0
  %1816 = vmatpush2.msra.mxu0 0.0
  %1817 = vmatprep.subr.mxu0 0.0
  %1818 = vmatpush2.msra.mxu0 0.0
  %1819 = vmatprep.subr.mxu0 0.0
  %1820 = vmatpush2.msra.mxu0 0.0
  %1821 = vmatprep.subr.mxu0 0.0
  %1822 = vmatpush2.msra.mxu0 0.0
  %1823 = vmatprep.subr.mxu0 0.0
  %1824 = vmatpush2.msra.mxu0 0.0
  %1825 = vmatprep.subr.mxu0 0.0
  %1826 = vmatpush2.msra.mxu0 0.0
  %1827 = vmatprep.subr.mxu0 0.0
  %1828 = vmatpush2.msra.mxu0 0.0
  %1829 = vmatprep.subr.mxu0 0.0
  %1830 = vmatpush2.msra.mxu0 0.0
  %1831 = vmatprep.subr.mxu0 0.0
  %1832 = vmatpush2.msra.mxu0 0.0
  %1833 = vmatprep.subr.mxu0 0.0
  %1834 = vmatpush2.msra.mxu0 0.0
  %1835 = vmatprep.subr.mxu0 0.0
  %1836 = vmatpush2.msra.mxu0 0.0
  %1837 = vmatprep.subr.mxu0 0.0
  %1838 = vmatpush2.msra.mxu0 0.0
  %1839 = vmatprep.subr.mxu0 0.0
  %1840 = vmatpush2.msra.mxu0 0.0
  %1841 = vmatprep.mubr.f32.mxu0 0.0
  %1842 = vmatmul.mubr.f32.gmra.mxu0 %v1773
  %v1843 = vpop.f32.mrf.mxu0
  %v1844 = vadd.f32 0.0, %v1843
  %v1845 = vpop.f32.mrf.mxu0
  %1846 = vmatprep.mubr.f32.mxu0 0.0
  %1847 = vmatmul.mubr.f32.gmra.mxu0 %v1775
  %v1848 = vpop.f32.mrf.mxu0
  %v1849 = vadd.f32 0.0, %v1848
  %v1850 = vpop.f32.mrf.mxu0
  %1851 = vdwg.mxu0
  %v1852 = vadd.f32 %v1765, %v1844
  %v1853 = vadd.f32 %v1766, %v1849
  %v1854 = vtanh.pop %v1852
  %v1855 = vtanh.pop %v1853
  %v1856 = vmul.f32 %v1854, %v33
  %v1857 = vmul.f32 %v1855, %v33
  %v1858 = vadd.f32 %v1856, %v34
  %v1859 = vadd.f32 %v1857, %v34
  %v1860 = vmul.f32 %v1858, %v1750
  %v1861 = vmul.f32 %v1859, %v1751
  %1864 = vrot.lane.b32.xlu0 %v1858, 64
  %v1865 = vpop.permute.xlu0 %1864
  %1866 = vrot.lane.b32.xlu0 %v1859, 64
  %v1867 = vpop.permute.xlu0 %1866
  %v1870 = vmul.f32 %v1858, %v1865
  %v1871 = vmul.f32 %v1859, %v1867
  %1874 = vrot.lane.b32.xlu0 %v1870, 32
  %v1875 = vpop.permute.xlu0 %1874
  %1876 = vrot.lane.b32.xlu0 %v1871, 32
  %v1877 = vpop.permute.xlu0 %1876
  %v1880 = vadd.f32 %v1860, %v1875
  %v1881 = vadd.f32 %v1861, %v1877
  %v1882 = vtanh.pop %v1880
  %v1883 = vtanh.pop %v1881
  %1886 = vrot.lane.b32.xlu0 %v1882, 64
  %v1887 = vpop.permute.xlu0 %1886
  %1888 = vrot.lane.b32.xlu0 %v1883, 64
  %v1889 = vpop.permute.xlu0 %1888
  %v1892 = vmul.f32 %v1858, %v1887
  %v1893 = vmul.f32 %v1859, %v1889
  %s1894 = scalar_lea.vmem [#allocation2], 64
  %v1895 = vld [vmem:[%s1894] sm:$0xff]
  %v1896 = vld [vmem:[%s1894 + $0x8] sm:$0xff]
  %1899 = vrot.lane.b32.xlu0 %v1892, 32
  %v1900 = vpop.permute.xlu0 %1899
  %1901 = vrot.lane.b32.xlu0 %v1893, 32
  %v1902 = vpop.permute.xlu0 %1901
  %v1903 = vsel %vm41, %v1900, 0
  %v1905 = vsel %vm41, %v1902, 0
  %1907 = vmatprep.subr.mxu0 0.0
  %1908 = vmatpush1.msra.mxu0 0.0
  %1909 = vmatprep.subr.mxu0 0.0
  %1910 = vmatpush1.msra.mxu0 0.0
  %1911 = vmatprep.subr.mxu0 0.0
  %1912 = vmatpush1.msra.mxu0 0.0
  %1913 = vmatprep.subr.mxu0 0.0
  %1914 = vmatpush1.msra.mxu0 0.0
  %1915 = vmatprep.subr.mxu0 0.0
  %1916 = vmatpush1.msra.mxu0 0.0
  %1917 = vmatprep.subr.mxu0 0.0
  %1918 = vmatpush1.msra.mxu0 0.0
  %1919 = vmatprep.subr.mxu0 0.0
  %1920 = vmatpush1.msra.mxu0 0.0
  %1921 = vmatprep.subr.mxu0 0.0
  %1922 = vmatpush1.msra.mxu0 0.0
  %1923 = vmatprep.subr.mxu0 0.0
  %1924 = vmatpush1.msra.mxu0 0.0
  %1925 = vmatprep.subr.mxu0 0.0
  %1926 = vmatpush1.msra.mxu0 0.0
  %1927 = vmatprep.subr.mxu0 0.0
  %1928 = vmatpush1.msra.mxu0 0.0
  %1929 = vmatprep.subr.mxu0 0.0
  %1930 = vmatpush1.msra.mxu0 0.0
  %1931 = vmatprep.subr.mxu0 0.0
  %1932 = vmatpush1.msra.mxu0 %v1386
  %1933 = vmatprep.subr.mxu0 0.0
  %1934 = vmatpush1.msra.mxu0 %v1385
  %1935 = vmatprep.subr.mxu0 0.0
  %1936 = vmatpush1.msra.mxu0 %v1384
  %1937 = vmatprep.subr.mxu0 0.0
  %1938 = vmatpush1.msra.mxu0 %v1383
  %1939 = vmatprep.subr.mxu0 0.0
  %1940 = vmatpush2.msra.mxu0 0.0
  %1941 = vmatprep.subr.mxu0 0.0
  %1942 = vmatpush2.msra.mxu0 0.0
  %1943 = vmatprep.subr.mxu0 0.0
  %1944 = vmatpush2.msra.mxu0 0.0
  %1945 = vmatprep.subr.mxu0 0.0
  %1946 = vmatpush2.msra.mxu0 0.0
  %1947 = vmatprep.subr.mxu0 0.0
  %1948 = vmatpush2.msra.mxu0 0.0
  %1949 = vmatprep.subr.mxu0 0.0
  %1950 = vmatpush2.msra.mxu0 0.0
  %1951 = vmatprep.subr.mxu0 0.0
  %1952 = vmatpush2.msra.mxu0 0.0
  %1953 = vmatprep.subr.mxu0 0.0
  %1954 = vmatpush2.msra.mxu0 0.0
  %1955 = vmatprep.subr.mxu0 0.0
  %1956 = vmatpush2.msra.mxu0 0.0
  %1957 = vmatprep.subr.mxu0 0.0
  %1958 = vmatpush2.msra.mxu0 0.0
  %1959 = vmatprep.subr.mxu0 0.0
  %1960 = vmatpush2.msra.mxu0 0.0
  %1961 = vmatprep.subr.mxu0 0.0
  %1962 = vmatpush2.msra.mxu0 0.0
  %1963 = vmatprep.subr.mxu0 0.0
  %1964 = vmatpush2.msra.mxu0 0.0
  %1965 = vmatprep.subr.mxu0 0.0
  %1966 = vmatpush2.msra.mxu0 0.0
  %1967 = vmatprep.subr.mxu0 0.0
  %1968 = vmatpush2.msra.mxu0 0.0
  %1969 = vmatprep.subr.mxu0 0.0
  %1970 = vmatpush2.msra.mxu0 0.0
  %1971 = vmatprep.mubr.f32.mxu0 0.0
  %1972 = vmatmul.mubr.f32.gmra.mxu0 %v1903
  %v1973 = vpop.f32.mrf.mxu0
  %v1974 = vadd.f32 0.0, %v1973
  %v1975 = vpop.f32.mrf.mxu0
  %1976 = vmatprep.mubr.f32.mxu0 0.0
  %1977 = vmatmul.mubr.f32.gmra.mxu0 %v1905
  %v1978 = vpop.f32.mrf.mxu0
  %v1979 = vadd.f32 0.0, %v1978
  %v1980 = vpop.f32.mrf.mxu0
  %1981 = vdwg.mxu0
  %v1982 = vadd.f32 %v1895, %v1974
  %v1983 = vadd.f32 %v1896, %v1979
  %v1984 = vtanh.pop %v1982
  %v1985 = vtanh.pop %v1983
  %v1986 = vmul.f32 %v1984, %v33
  %v1987 = vmul.f32 %v1985, %v33
  %v1988 = vadd.f32 %v1986, %v34
  %v1989 = vadd.f32 %v1987, %v34
  %v1990 = vmul.f32 %v1988, %v1880
  %v1991 = vmul.f32 %v1989, %v1881
  %1994 = vrot.lane.b32.xlu0 %v1988, 64
  %v1995 = vpop.permute.xlu0 %1994
  %1996 = vrot.lane.b32.xlu0 %v1989, 64
  %v1997 = vpop.permute.xlu0 %1996
  %v2000 = vmul.f32 %v1988, %v1995
  %v2001 = vmul.f32 %v1989, %v1997
  %2004 = vrot.lane.b32.xlu0 %v2000, 32
  %v2005 = vpop.permute.xlu0 %2004
  %2006 = vrot.lane.b32.xlu0 %v2001, 32
  %v2007 = vpop.permute.xlu0 %2006
  %v2010 = vadd.f32 %v1990, %v2005
  %v2011 = vadd.f32 %v1991, %v2007
  %v2012 = vtanh.pop %v2010
  %v2013 = vtanh.pop %v2011
  %2016 = vrot.lane.b32.xlu0 %v2012, 64
  %v2017 = vpop.permute.xlu0 %2016
  %2018 = vrot.lane.b32.xlu0 %v2013, 64
  %v2019 = vpop.permute.xlu0 %2018
  %v2022 = vmul.f32 %v1988, %v2017
  %v2023 = vmul.f32 %v1989, %v2019
  %s2024 = scalar_lea.vmem [#allocation2], 80
  %v2025 = vld [vmem:[%s2024] sm:$0xff]
  %v2026 = vld [vmem:[%s2024 + $0x8] sm:$0xff]
  %2029 = vrot.lane.b32.xlu0 %v2022, 32
  %v2030 = vpop.permute.xlu0 %2029
  %2031 = vrot.lane.b32.xlu0 %v2023, 32
  %v2032 = vpop.permute.xlu0 %2031
  %v2033 = vsel %vm41, %v2030, 0
  %v2035 = vsel %vm41, %v2032, 0
  %2037 = vmatprep.subr.mxu0 0.0
  %2038 = vmatpush1.msra.mxu0 0.0
  %2039 = vmatprep.subr.mxu0 0.0
  %2040 = vmatpush1.msra.mxu0 0.0
  %2041 = vmatprep.subr.mxu0 0.0
  %2042 = vmatpush1.msra.mxu0 0.0
  %2043 = vmatprep.subr.mxu0 0.0
  %2044 = vmatpush1.msra.mxu0 0.0
  %2045 = vmatprep.subr.mxu0 0.0
  %2046 = vmatpush1.msra.mxu0 0.0
  %2047 = vmatprep.subr.mxu0 0.0
  %2048 = vmatpush1.msra.mxu0 0.0
  %2049 = vmatprep.subr.mxu0 0.0
  %2050 = vmatpush1.msra.mxu0 0.0
  %2051 = vmatprep.subr.mxu0 0.0
  %2052 = vmatpush1.msra.mxu0 0.0
  %2053 = vmatprep.subr.mxu0 0.0
  %2054 = vmatpush1.msra.mxu0 0.0
  %2055 = vmatprep.subr.mxu0 0.0
  %2056 = vmatpush1.msra.mxu0 0.0
  %2057 = vmatprep.subr.mxu0 0.0
  %2058 = vmatpush1.msra.mxu0 0.0
  %2059 = vmatprep.subr.mxu0 0.0
  %2060 = vmatpush1.msra.mxu0 0.0
  %2061 = vmatprep.subr.mxu0 0.0
  %2062 = vmatpush1.msra.mxu0 %v1386
  %2063 = vmatprep.subr.mxu0 0.0
  %2064 = vmatpush1.msra.mxu0 %v1385
  %2065 = vmatprep.subr.mxu0 0.0
  %2066 = vmatpush1.msra.mxu0 %v1384
  %2067 = vmatprep.subr.mxu0 0.0
  %2068 = vmatpush1.msra.mxu0 %v1383
  %2069 = vmatprep.subr.mxu0 0.0
  %2070 = vmatpush2.msra.mxu0 0.0
  %2071 = vmatprep.subr.mxu0 0.0
  %2072 = vmatpush2.msra.mxu0 0.0
  %2073 = vmatprep.subr.mxu0 0.0
  %2074 = vmatpush2.msra.mxu0 0.0
  %2075 = vmatprep.subr.mxu0 0.0
  %2076 = vmatpush2.msra.mxu0 0.0
  %2077 = vmatprep.subr.mxu0 0.0
  %2078 = vmatpush2.msra.mxu0 0.0
  %2079 = vmatprep.subr.mxu0 0.0
  %2080 = vmatpush2.msra.mxu0 0.0
  %2081 = vmatprep.subr.mxu0 0.0
  %2082 = vmatpush2.msra.mxu0 0.0
  %2083 = vmatprep.subr.mxu0 0.0
  %2084 = vmatpush2.msra.mxu0 0.0
  %2085 = vmatprep.subr.mxu0 0.0
  %2086 = vmatpush2.msra.mxu0 0.0
  %2087 = vmatprep.subr.mxu0 0.0
  %2088 = vmatpush2.msra.mxu0 0.0
  %2089 = vmatprep.subr.mxu0 0.0
  %2090 = vmatpush2.msra.mxu0 0.0
  %2091 = vmatprep.subr.mxu0 0.0
  %2092 = vmatpush2.msra.mxu0 0.0
  %2093 = vmatprep.subr.mxu0 0.0
  %2094 = vmatpush2.msra.mxu0 0.0
  %2095 = vmatprep.subr.mxu0 0.0
  %2096 = vmatpush2.msra.mxu0 0.0
  %2097 = vmatprep.subr.mxu0 0.0
  %2098 = vmatpush2.msra.mxu0 0.0
  %2099 = vmatprep.subr.mxu0 0.0
  %2100 = vmatpush2.msra.mxu0 0.0
  %2101 = vmatprep.mubr.f32.mxu0 0.0
  %2102 = vmatmul.mubr.f32.gmra.mxu0 %v2033
  %v2103 = vpop.f32.mrf.mxu0
  %v2104 = vadd.f32 0.0, %v2103
  %v2105 = vpop.f32.mrf.mxu0
  %2106 = vmatprep.mubr.f32.mxu0 0.0
  %2107 = vmatmul.mubr.f32.gmra.mxu0 %v2035
  %v2108 = vpop.f32.mrf.mxu0
  %v2109 = vadd.f32 0.0, %v2108
  %v2110 = vpop.f32.mrf.mxu0
  %2111 = vdwg.mxu0
  %v2112 = vadd.f32 %v2025, %v2104
  %v2113 = vadd.f32 %v2026, %v2109
  %v2114 = vtanh.pop %v2112
  %v2115 = vtanh.pop %v2113
  %v2116 = vmul.f32 %v2114, %v33
  %v2117 = vmul.f32 %v2115, %v33
  %v2118 = vadd.f32 %v2116, %v34
  %v2119 = vadd.f32 %v2117, %v34
  %v2120 = vmul.f32 %v2118, %v2010
  %v2121 = vmul.f32 %v2119, %v2011
  %2124 = vrot.lane.b32.xlu0 %v2118, 64
  %v2125 = vpop.permute.xlu0 %2124
  %2126 = vrot.lane.b32.xlu0 %v2119, 64
  %v2127 = vpop.permute.xlu0 %2126
  %v2130 = vmul.f32 %v2118, %v2125
  %v2131 = vmul.f32 %v2119, %v2127
  %2134 = vrot.lane.b32.xlu0 %v2130, 32
  %v2135 = vpop.permute.xlu0 %2134
  %2136 = vrot.lane.b32.xlu0 %v2131, 32
  %v2137 = vpop.permute.xlu0 %2136
  %v2140 = vadd.f32 %v2120, %v2135
  %v2141 = vadd.f32 %v2121, %v2137
  %v2142 = vtanh.pop %v2140
  %v2143 = vtanh.pop %v2141
  %2146 = vrot.lane.b32.xlu0 %v2142, 64
  %v2147 = vpop.permute.xlu0 %2146
  %2148 = vrot.lane.b32.xlu0 %v2143, 64
  %v2149 = vpop.permute.xlu0 %2148
  %v2152 = vmul.f32 %v2118, %v2147
  %v2153 = vmul.f32 %v2119, %v2149
  %s2154 = scalar_lea.vmem [#allocation2], 96
  %v2155 = vld [vmem:[%s2154] sm:$0xff]
  %v2156 = vld [vmem:[%s2154 + $0x8] sm:$0xff]
  %2159 = vrot.lane.b32.xlu0 %v2152, 32
  %v2160 = vpop.permute.xlu0 %2159
  %2161 = vrot.lane.b32.xlu0 %v2153, 32
  %v2162 = vpop.permute.xlu0 %2161
  %v2163 = vsel %vm41, %v2160, 0
  %v2165 = vsel %vm41, %v2162, 0
  %2167 = vmatprep.subr.mxu0 0.0
  %2168 = vmatpush1.msra.mxu0 0.0
  %2169 = vmatprep.subr.mxu0 0.0
  %2170 = vmatpush1.msra.mxu0 0.0
  %2171 = vmatprep.subr.mxu0 0.0
  %2172 = vmatpush1.msra.mxu0 0.0
  %2173 = vmatprep.subr.mxu0 0.0
  %2174 = vmatpush1.msra.mxu0 0.0
  %2175 = vmatprep.subr.mxu0 0.0
  %2176 = vmatpush1.msra.mxu0 0.0
  %2177 = vmatprep.subr.mxu0 0.0
  %2178 = vmatpush1.msra.mxu0 0.0
  %2179 = vmatprep.subr.mxu0 0.0
  %2180 = vmatpush1.msra.mxu0 0.0
  %2181 = vmatprep.subr.mxu0 0.0
  %2182 = vmatpush1.msra.mxu0 0.0
  %2183 = vmatprep.subr.mxu0 0.0
  %2184 = vmatpush1.msra.mxu0 0.0
  %2185 = vmatprep.subr.mxu0 0.0
  %2186 = vmatpush1.msra.mxu0 0.0
  %2187 = vmatprep.subr.mxu0 0.0
  %2188 = vmatpush1.msra.mxu0 0.0
  %2189 = vmatprep.subr.mxu0 0.0
  %2190 = vmatpush1.msra.mxu0 0.0
  %2191 = vmatprep.subr.mxu0 0.0
  %2192 = vmatpush1.msra.mxu0 %v1386
  %2193 = vmatprep.subr.mxu0 0.0
  %2194 = vmatpush1.msra.mxu0 %v1385
  %2195 = vmatprep.subr.mxu0 0.0
  %2196 = vmatpush1.msra.mxu0 %v1384
  %2197 = vmatprep.subr.mxu0 0.0
  %2198 = vmatpush1.msra.mxu0 %v1383
  %2199 = vmatprep.subr.mxu0 0.0
  %2200 = vmatpush2.msra.mxu0 0.0
  %2201 = vmatprep.subr.mxu0 0.0
  %2202 = vmatpush2.msra.mxu0 0.0
  %2203 = vmatprep.subr.mxu0 0.0
  %2204 = vmatpush2.msra.mxu0 0.0
  %2205 = vmatprep.subr.mxu0 0.0
  %2206 = vmatpush2.msra.mxu0 0.0
  %2207 = vmatprep.subr.mxu0 0.0
  %2208 = vmatpush2.msra.mxu0 0.0
  %2209 = vmatprep.subr.mxu0 0.0
  %2210 = vmatpush2.msra.mxu0 0.0
  %2211 = vmatprep.subr.mxu0 0.0
  %2212 = vmatpush2.msra.mxu0 0.0
  %2213 = vmatprep.subr.mxu0 0.0
  %2214 = vmatpush2.msra.mxu0 0.0
  %2215 = vmatprep.subr.mxu0 0.0
  %2216 = vmatpush2.msra.mxu0 0.0
  %2217 = vmatprep.subr.mxu0 0.0
  %2218 = vmatpush2.msra.mxu0 0.0
  %2219 = vmatprep.subr.mxu0 0.0
  %2220 = vmatpush2.msra.mxu0 0.0
  %2221 = vmatprep.subr.mxu0 0.0
  %2222 = vmatpush2.msra.mxu0 0.0
  %2223 = vmatprep.subr.mxu0 0.0
  %2224 = vmatpush2.msra.mxu0 0.0
  %2225 = vmatprep.subr.mxu0 0.0
  %2226 = vmatpush2.msra.mxu0 0.0
  %2227 = vmatprep.subr.mxu0 0.0
  %2228 = vmatpush2.msra.mxu0 0.0
  %2229 = vmatprep.subr.mxu0 0.0
  %2230 = vmatpush2.msra.mxu0 0.0
  %2231 = vmatprep.mubr.f32.mxu0 0.0
  %2232 = vmatmul.mubr.f32.gmra.mxu0 %v2163
  %v2233 = vpop.f32.mrf.mxu0
  %v2234 = vadd.f32 0.0, %v2233
  %v2235 = vpop.f32.mrf.mxu0
  %2236 = vmatprep.mubr.f32.mxu0 0.0
  %2237 = vmatmul.mubr.f32.gmra.mxu0 %v2165
  %v2238 = vpop.f32.mrf.mxu0
  %v2239 = vadd.f32 0.0, %v2238
  %v2240 = vpop.f32.mrf.mxu0
  %2241 = vdwg.mxu0
  %v2242 = vadd.f32 %v2155, %v2234
  %v2243 = vadd.f32 %v2156, %v2239
  %v2244 = vtanh.pop %v2242
  %v2245 = vtanh.pop %v2243
  %v2246 = vmul.f32 %v2244, %v33
  %v2247 = vmul.f32 %v2245, %v33
  %v2248 = vadd.f32 %v2246, %v34
  %v2249 = vadd.f32 %v2247, %v34
  %v2250 = vmul.f32 %v2248, %v2140
  %v2251 = vmul.f32 %v2249, %v2141
  %2254 = vrot.lane.b32.xlu0 %v2248, 64
  %v2255 = vpop.permute.xlu0 %2254
  %2256 = vrot.lane.b32.xlu0 %v2249, 64
  %v2257 = vpop.permute.xlu0 %2256
  %v2260 = vmul.f32 %v2248, %v2255
  %v2261 = vmul.f32 %v2249, %v2257
  %2264 = vrot.lane.b32.xlu0 %v2260, 32
  %v2265 = vpop.permute.xlu0 %2264
  %2266 = vrot.lane.b32.xlu0 %v2261, 32
  %v2267 = vpop.permute.xlu0 %2266
  %v2270 = vadd.f32 %v2250, %v2265
  %v2271 = vadd.f32 %v2251, %v2267
  %v2272 = vtanh.pop %v2270
  %v2273 = vtanh.pop %v2271
  %2276 = vrot.lane.b32.xlu0 %v2272, 64
  %v2277 = vpop.permute.xlu0 %2276
  %2278 = vrot.lane.b32.xlu0 %v2273, 64
  %v2279 = vpop.permute.xlu0 %2278
  %v2282 = vmul.f32 %v2248, %v2277
  %v2283 = vmul.f32 %v2249, %v2279
  %s2284 = scalar_lea.vmem [#allocation2], 112
  %v2285 = vld [vmem:[%s2284] sm:$0xff]
  %v2286 = vld [vmem:[%s2284 + $0x8] sm:$0xff]
  %2289 = vrot.lane.b32.xlu0 %v2282, 32
  %v2290 = vpop.permute.xlu0 %2289
  %2291 = vrot.lane.b32.xlu0 %v2283, 32
  %v2292 = vpop.permute.xlu0 %2291
  %v2293 = vsel %vm41, %v2290, 0
  %v2295 = vsel %vm41, %v2292, 0
  %2297 = vmatprep.subr.mxu0 0.0
  %2298 = vmatpush1.msra.mxu0 0.0
  %2299 = vmatprep.subr.mxu0 0.0
  %2300 = vmatpush1.msra.mxu0 0.0
  %2301 = vmatprep.subr.mxu0 0.0
  %2302 = vmatpush1.msra.mxu0 0.0
  %2303 = vmatprep.subr.mxu0 0.0
  %2304 = vmatpush1.msra.mxu0 0.0
  %2305 = vmatprep.subr.mxu0 0.0
  %2306 = vmatpush1.msra.mxu0 0.0
  %2307 = vmatprep.subr.mxu0 0.0
  %2308 = vmatpush1.msra.mxu0 0.0
  %2309 = vmatprep.subr.mxu0 0.0
  %2310 = vmatpush1.msra.mxu0 0.0
  %2311 = vmatprep.subr.mxu0 0.0
  %2312 = vmatpush1.msra.mxu0 0.0
  %2313 = vmatprep.subr.mxu0 0.0
  %2314 = vmatpush1.msra.mxu0 0.0
  %2315 = vmatprep.subr.mxu0 0.0
  %2316 = vmatpush1.msra.mxu0 0.0
  %2317 = vmatprep.subr.mxu0 0.0
  %2318 = vmatpush1.msra.mxu0 0.0
  %2319 = vmatprep.subr.mxu0 0.0
  %2320 = vmatpush1.msra.mxu0 0.0
  %2321 = vmatprep.subr.mxu0 0.0
  %2322 = vmatpush1.msra.mxu0 %v1386
  %2323 = vmatprep.subr.mxu0 0.0
  %2324 = vmatpush1.msra.mxu0 %v1385
  %2325 = vmatprep.subr.mxu0 0.0
  %2326 = vmatpush1.msra.mxu0 %v1384
  %2327 = vmatprep.subr.mxu0 0.0
  %2328 = vmatpush1.msra.mxu0 %v1383
  %2329 = vmatprep.subr.mxu0 0.0
  %2330 = vmatpush2.msra.mxu0 0.0
  %2331 = vmatprep.subr.mxu0 0.0
  %2332 = vmatpush2.msra.mxu0 0.0
  %2333 = vmatprep.subr.mxu0 0.0
  %2334 = vmatpush2.msra.mxu0 0.0
  %2335 = vmatprep.subr.mxu0 0.0
  %2336 = vmatpush2.msra.mxu0 0.0
  %2337 = vmatprep.subr.mxu0 0.0
  %2338 = vmatpush2.msra.mxu0 0.0
  %2339 = vmatprep.subr.mxu0 0.0
  %2340 = vmatpush2.msra.mxu0 0.0
  %2341 = vmatprep.subr.mxu0 0.0
  %2342 = vmatpush2.msra.mxu0 0.0
  %2343 = vmatprep.subr.mxu0 0.0
  %2344 = vmatpush2.msra.mxu0 0.0
  %2345 = vmatprep.subr.mxu0 0.0
  %2346 = vmatpush2.msra.mxu0 0.0
  %2347 = vmatprep.subr.mxu0 0.0
  %2348 = vmatpush2.msra.mxu0 0.0
  %2349 = vmatprep.subr.mxu0 0.0
  %2350 = vmatpush2.msra.mxu0 0.0
  %2351 = vmatprep.subr.mxu0 0.0
  %2352 = vmatpush2.msra.mxu0 0.0
  %2353 = vmatprep.subr.mxu0 0.0
  %2354 = vmatpush2.msra.mxu0 0.0
  %2355 = vmatprep.subr.mxu0 0.0
  %2356 = vmatpush2.msra.mxu0 0.0
  %2357 = vmatprep.subr.mxu0 0.0
  %2358 = vmatpush2.msra.mxu0 0.0
  %2359 = vmatprep.subr.mxu0 0.0
  %2360 = vmatpush2.msra.mxu0 0.0
  %2361 = vmatprep.mubr.f32.mxu0 0.0
  %2362 = vmatmul.mubr.f32.gmra.mxu0 %v2293
  %v2363 = vpop.f32.mrf.mxu0
  %v2364 = vadd.f32 0.0, %v2363
  %v2365 = vpop.f32.mrf.mxu0
  %2366 = vmatprep.mubr.f32.mxu0 0.0
  %2367 = vmatmul.mubr.f32.gmra.mxu0 %v2295
  %v2368 = vpop.f32.mrf.mxu0
  %v2369 = vadd.f32 0.0, %v2368
  %v2370 = vpop.f32.mrf.mxu0
  %2371 = vdwg.mxu0
  %v2372 = vadd.f32 %v2285, %v2364
  %v2373 = vadd.f32 %v2286, %v2369
  %v2374 = vtanh.pop %v2372
  %v2375 = vtanh.pop %v2373
  %v2376 = vmul.f32 %v2374, %v33
  %v2377 = vmul.f32 %v2375, %v33
  %v2378 = vadd.f32 %v2376, %v34
  %v2379 = vadd.f32 %v2377, %v34
  %v2380 = vmul.f32 %v2378, %v2270
  %v2381 = vmul.f32 %v2379, %v2271
  %2384 = vrot.lane.b32.xlu0 %v2378, 64
  %v2385 = vpop.permute.xlu0 %2384
  %2386 = vrot.lane.b32.xlu0 %v2379, 64
  %v2387 = vpop.permute.xlu0 %2386
  %v2390 = vmul.f32 %v2378, %v2385
  %v2391 = vmul.f32 %v2379, %v2387
  %2394 = vrot.lane.b32.xlu0 %v2390, 32
  %v2395 = vpop.permute.xlu0 %2394
  %2396 = vrot.lane.b32.xlu0 %v2391, 32
  %v2397 = vpop.permute.xlu0 %2396
  %v2400 = vadd.f32 %v2380, %v2395
  %v2401 = vadd.f32 %v2381, %v2397
  %v2402 = vtanh.pop %v2400
  %v2403 = vtanh.pop %v2401
  %2406 = vrot.lane.b32.xlu0 %v2402, 64
  %v2407 = vpop.permute.xlu0 %2406
  %2408 = vrot.lane.b32.xlu0 %v2403, 64
  %v2409 = vpop.permute.xlu0 %2408
  %v2412 = vmul.f32 %v2378, %v2407
  %v2413 = vmul.f32 %v2379, %v2409
  %v2414 = vld [vmem:[%s5] sm:$0x1]
  %v2416 = vlaneseq
  %v2417 = vshrl.u32 %v2416, 7
  %v2418 = vsub.s32 0, %v2417
  %v2419 = vrot.slane %v2414, %v2418
  %2420 = vrot.lane.b32.xlu0 %v2419, 96
  %v2421 = vpop.permute.xlu0 %2420
  %v2423 = vmul.f32 %v2412, %v2421
  %v2424 = vmul.f32 %v2413, %v2421
  %2427 = vrot.lane.b32.xlu0 %v2423, 32
  %v2428 = vpop.permute.xlu0 %2427
  %2429 = vrot.lane.b32.xlu0 %v2424, 32
  %v2430 = vpop.permute.xlu0 %2429
  %v2433 = vsel %vm41, %v2428, 0.0
  %2434 = vadd.xlane.f32.xlu0 %v2433
  %v2435 = vpop.xlane.xlu0 %2434
  %v2436 = vsel %vm41, %v2430, 0.0
  %2437 = vadd.xlane.f32.xlu0 %v2436
  %v2438 = vpop.xlane.xlu0 %2437
  %v2439 = vld [vmem:[#allocation4] sm:$0x1]
  %v2441 = vlaneseq
  %v2442 = vshrl.u32 %v2441, 7
  %v2443 = vsub.s32 0, %v2442
  %v2444 = vrot.slane %v2439, %v2443
  %v2446 = vadd.f32 %v2435, %v2444
  %v2447 = vadd.f32 %v2438, %v2444
  %vm2448 = vcmask 7168
  %2449 = vst.msk [vmem:[%s7] sm:$0xff] %vm2448, %v2446
  %2450 = vst.msk [vmem:[%s7 + $0x8] sm:$0xff] %vm2448, %v2447
  // Predicated region
  $region30: #{lstm_forward.1} parent=0 // pred_check
    _
  $region31: #{lstm_forward.1} parent=0 // pred_check_branch
    %2452 = sbr.rel (0) target = $region33
  $region32: #{lstm_forward.1} parent=0 // pred_region
    _
  $region33: #{lstm_forward.1} parent=0 // pred_fallthru
    _
  // Predicated region
  $region34: #{lstm_forward.1} parent=0 // pred_check
    _
  $region35: #{lstm_forward.1} parent=0 // pred_check_branch
    %2454 = sbr.rel (0) target = $region37
  $region36: #{lstm_forward.1} parent=0 // pred_region
    _
  $region37: #{lstm_forward.1} parent=0 // pred_fallthru
    _

</llo_original>
